<compile_context>
chip_gen: v5e
topology: v5e:2x2
jax: 0.10.0
libtpu: 0.0.40
codegen_flags: <defaults>
</compile_context>

<pallas_src>
import jax
import jax.numpy as jnp
from jax.experimental import pallas as pl
from jax.experimental.pallas import tpu as pltpu

NUM_CLASSES = 10  # Config.NUM_CLASSES


# --------------------------------------------------------------------------
# Fused Pallas kernel (built for a fixed, fully static geometry)
# --------------------------------------------------------------------------
def _make_cnn_kernel(B, H, W, C1, C2, D, ncls):
    # Static geometry (Python ints -> fully unrolled, static slices only).
    Hc1, Wc1 = H - 2, W - 2            # conv1 output
    Hp1, Wp1 = Hc1 // 2, Wc1 // 2      # pool1 output (floor)
    Hc2, Wc2 = Hp1 - 2, Wp1 - 2        # conv2 output
    Hp2, Wp2 = Hc2 // 2, Wc2 // 2      # pool2 output (floor)
    Ph, Pw = 2 * Hp2, 2 * Wp2          # conv2 positions pool2 actually keeps
    Hn, Wn = Ph + 2, Pw + 2            # pool1 rows / cols conv2 actually reads
    M2 = B * Ph * Pw                   # conv2 im2col rows  (= 32 at B=2)
    K2 = 9 * C1                        # conv2 im2col depth (= 288)
    F = Hp2 * Wp2 * C2                 # fc1 fan-in         (= 256)

    def kernel(x_ref, w1_ref, b1_ref, w2_ref, b2_ref,
               wfc1_ref, bfc1_ref, wfc2_ref, bfc2_ref,
               o_ref, p1_ref, im2col_ref, feat_ref):
        # x_ref     : (B, H, W, C1)   input, lane-broadcast on host (dense tiles)
        # w1_ref    : (9, 1, C1)      conv1 taps, [dh*3+dw, 0, cout]
        # b1_ref    : (1, C1)
        # w2_ref    : (K2, C2)        conv2 im2col weights, row = (dh*3+dw)*C1+cin
        # b2_ref    : (1, C2)
        # wfc1_ref  : (F, D)          fc1 weights, rows in (hp, wp, c) order
        # bfc1_ref  : (1, D)
        # wfc2_ref  : (D, ncls)
        # bfc2_ref  : (1, ncls)
        # o_ref     : (B, ncls)
        # p1_ref    : VMEM scratch (B, Hn, Wn, C1)  compacted pool1 output
        # im2col_ref: VMEM scratch (M2, K2)
        # feat_ref  : VMEM scratch (B, F)

        w1 = w1_ref[...]                                   # (9, 1, C1)

        # ---- conv1 (3x3 VALID, Cin=1) + bias + ReLU : pure VPU ----------------
        # dw-outer / dh-inner: one ref load per dw window, dh slices are free
        # leading-dim selections of the same value.  First tap seeds the
        # accumulator; bias is folded into the ReLU step (no broadcast init).
        acc1 = None
        for dw in range(3):
            xw = x_ref[:, :, dw:dw + Wc1, :]               # (B, H, Wc1, C1)
            for dh in range(3):
                term = xw[:, dh:dh + Hc1] * w1[dh * 3 + dw]
                acc1 = term if acc1 is None else acc1 + term
        act1 = jnp.maximum(acc1 + b1_ref[...], 0.0)        # (B, Hc1, Wc1, C1)

        # ---- pool1 (2x2, stride 2, floor) --------------------------------------
        # H direction: leading-dim reshape + elementwise max (no relayout).
        tp = act1[:, :2 * Hp1].reshape(B, Hp1, 2, Wc1, C1)
        th = jnp.maximum(tp[:, :, 0], tp[:, :, 1])         # (B, Hp1, Wc1, C1)
        # W direction (sublane dim): per-output-column max of two size-1 static
        # slices, compacted by storing each column into the p1 scratch.  Only
        # the Hn x Wn region conv2 reads is produced.
        for xc in range(Wn):
            col = jnp.maximum(th[:, :Hn, 2 * xc:2 * xc + 1, :],
                              th[:, :Hn, 2 * xc + 1:2 * xc + 2, :])  # (B,Hn,1,C1)
            p1_ref[:, :, xc:xc + 1, :] = col

        # TODO(synk): Dropout layers are identity at inference time; omitted.

        # ---- conv2: im2col assembly + ONE MXU matmul ---------------------------
        # For each (b, i) output-row group, lane-concatenate the nine
        # (Pw, C1) tap windows into a (Pw, 9*C1) strip and store it as one
        # full-width, lane-aligned row block of the im2col matrix.
        for b in range(B):
            rows = [p1_ref[b, y] for y in range(Hn)]       # each (Wn, C1)
            for i in range(Ph):
                strip = jnp.concatenate(
                    [rows[dh + i][dw:dw + Pw, :]
                     for dh in range(3) for dw in range(3)], axis=1)  # (Pw, K2)
                r0 = (b * Ph + i) * Pw
                im2col_ref[r0:r0 + Pw, :] = strip

        patches = im2col_ref[...]                          # (M2, K2) = (32, 288)
        act2 = jnp.dot(patches, w2_ref[...],
                       preferred_element_type=jnp.float32) + b2_ref[...]
        act2 = jnp.maximum(act2, 0.0)                      # (M2, C2), rows (b,i,j)

        # ---- pool2 (2x2, floor) + flatten to lane-dense (B, F) -----------------
        # Two shifted row-maxes give, at rows r=(b*Ph+2hp)*Pw+2wp, the max over
        # the 2x2 window {(2hp,2wp),(2hp,2wp+1),(2hp+1,2wp),(2hp+1,2wp+1)}.
        v1 = jnp.maximum(act2[:M2 - 1, :], act2[1:, :])
        v2 = jnp.maximum(v1[:M2 - 1 - Pw, :], v1[Pw:M2 - 1, :])
        for b in range(B):
            for hp in range(Hp2):
                for wp in range(Wp2):
                    r = (b * Ph + 2 * hp) * Pw + 2 * wp
                    c0 = (hp * Wp2 + wp) * C2
                    feat_ref[b:b + 1, c0:c0 + C2] = v2[r:r + 1, :]

        # ---- fc1 + ReLU + fc2 : two small MXU matmuls --------------------------
        feat = feat_ref[...]                               # (B, F) = (2, 256)
        hidden = jnp.maximum(
            jnp.dot(feat, wfc1_ref[...], preferred_element_type=jnp.float32)
            + bfc1_ref[...], 0.0)                          # (B, D)
        logits = jnp.dot(hidden, wfc2_ref[...],
                         preferred_element_type=jnp.float32) + bfc2_ref[...]
        o_ref[...] = logits.astype(o_ref.dtype)

    return kernel, (Hn, Wn, M2, K2, F)


# --------------------------------------------------------------------------
# Wrapper: one-time layout plumbing + single gridless pallas_call
# --------------------------------------------------------------------------
@jax.jit
def cnn_forward(params, x):
    """x: (B, H, W) float32 -> logits (B, NUM_CLASSES)."""
    B, H, W = x.shape
    C1 = params["conv1_w"].shape[0]
    C2 = params["conv2_w"].shape[0]
    D = params["fc1_w"].shape[1]
    ncls = params["fc2_w"].shape[1]
    Hc1, Wc1 = H - 2, W - 2
    Hp1, Wp1 = Hc1 // 2, Wc1 // 2
    Hc2, Wc2 = Hp1 - 2, Wp1 - 2
    Hp2, Wp2 = Hc2 // 2, Wc2 // 2
    assert params["fc1_w"].shape[0] == C2 * Hp2 * Wp2

    kernel, (Hn, Wn, M2, K2, F) = _make_cnn_kernel(B, H, W, C1, C2, D, ncls)

    # Tiny one-time layout shuffles on the host (done once by XLA outside
    # the kernel).  The input is broadcast to (B, H, W, C1) so every in-kernel
    # tile is lane-dense and conv1 needs no per-tap lane broadcasts.
    x_k = jnp.broadcast_to(x[:, :, :, None], (B, H, W, C1)).astype(jnp.float32)
    w1_k = jnp.transpose(params["conv1_w"][:, 0], (1, 2, 0)).reshape(9, 1, C1)
    b1_k = params["conv1_b"].reshape(1, C1)
    w2_k = jnp.transpose(params["conv2_w"], (2, 3, 1, 0)).reshape(9 * C1, C2)
    b2_k = params["conv2_b"].reshape(1, C2)
    # fc1 rows arrive in torch NCHW-flatten order (c*Hp2*Wp2 + hp*Wp2 + wp);
    # permute once to (hp, wp, c) row order so the in-kernel feature slab needs
    # no runtime transpose and fc1 is a single K = Hp2*Wp2*C2 matmul.
    wfc1_k = (params["fc1_w"].reshape(C2, Hp2, Wp2, D)
              .transpose(1, 2, 0, 3).reshape(Hp2 * Wp2 * C2, D))
    bfc1_k = params["fc1_b"].reshape(1, D)
    wfc2_k = params["fc2_w"]
    bfc2_k = params["fc2_b"].reshape(1, ncls)

    vmem = pl.BlockSpec(memory_space=pltpu.MemorySpace.VMEM)
    return pl.pallas_call(
        kernel,
        out_shape=jax.ShapeDtypeStruct((B, ncls), jnp.float32),
        in_specs=[vmem] * 9,
        out_specs=vmem,
        scratch_shapes=[
            pltpu.VMEM((B, Hn, Wn, C1), jnp.float32),   # compacted pool1
            pltpu.VMEM((M2, K2), jnp.float32),          # conv2 im2col
            pltpu.VMEM((B, F), jnp.float32),            # pooled features
        ],
        compiler_params=pltpu.CompilerParams(vmem_limit_bytes=32 * 1024 * 1024),
        # NOTE: at B=2 a grid + dimension_semantics=("parallel",) for v7x's
        # second TensorCore costs more in per-step overhead than it gains;
        # add a batch grid axis only for large batches.
    )(x_k, w1_k, b1_k, w2_k, b2_k, wfc1_k, bfc1_k, wfc2_k, bfc2_k)


# --------------------------------------------------------------------------
# Pure-JAX reference (same math, high precision) for a self-check
# --------------------------------------------------------------------------
def _reference_forward(params, x):
    hp = jax.lax.Precision.HIGHEST
    xn = x[:, None, :, :]                                                   # (B,1,H,W)
    y = jax.lax.conv_general_dilated(
        xn, params["conv1_w"], (1, 1), "VALID",
        dimension_numbers=("NCHW", "OIHW", "NCHW"), precision=hp)
    y = jnp.maximum(y + params["conv1_b"][None, :, None, None], 0.0)
    y = jax.lax.reduce_window(y, -jnp.inf, jax.lax.max,
                              (1, 1, 2, 2), (1, 1, 2, 2), "VALID")
    y = jax.lax.conv_general_dilated(
        y, params["conv2_w"], (1, 1), "VALID",
        dimension_numbers=("NCHW", "OIHW", "NCHW"), precision=hp)
    y = jnp.maximum(y + params["conv2_b"][None, :, None, None], 0.0)
    y = jax.lax.reduce_window(y, -jnp.inf, jax.lax.max,
                              (1, 1, 2, 2), (1, 1, 2, 2), "VALID")
    y = y.reshape(y.shape[0], -1)                                           # NCHW flatten
    y = jnp.maximum(jnp.dot(y, params["fc1_w"], precision=hp) + params["fc1_b"], 0.0)
    return jnp.dot(y, params["fc2_w"], precision=hp) + params["fc2_b"]


# --------------------------------------------------------------------------
# Main
# --------------------------------------------------------------------------
if __name__ == "__main__":
    key = jax.random.PRNGKey(0)
    ks = jax.random.split(key, 9)
    scale = 0.05

    # Small input consistent with the forward: B=2, 16x16 single-channel.
    # Pipeline: 16 -> conv 14 -> pool 7 -> conv 5 -> pool 2; LazyLinear in = 64*2*2.
    B, H, W = 2, 16, 16
    fc_in = 64 * 2 * 2

    params = {
        "conv1_w": scale * jax.random.normal(ks[0], (32, 1, 3, 3), jnp.float32),
        "conv1_b": scale * jax.random.normal(ks[1], (32,), jnp.float32),
        "conv2_w": scale * jax.random.normal(ks[2], (64, 32, 3, 3), jnp.float32),
        "conv2_b": scale * jax.random.normal(ks[3], (64,), jnp.float32),
        "fc1_w": scale * jax.random.normal(ks[4], (fc_in, 128), jnp.float32),
        "fc1_b": scale * jax.random.normal(ks[5], (128,), jnp.float32),
        "fc2_w": scale * jax.random.normal(ks[6], (128, NUM_CLASSES), jnp.float32),
        "fc2_b": scale * jax.random.normal(ks[7], (NUM_CLASSES,), jnp.float32),
    }
    x = jax.random.normal(ks[8], (B, H, W), jnp.float32)

    logits = cnn_forward(params, x)
    jax.block_until_ready(logits)
    assert logits.shape == (B, NUM_CLASSES)

    ref = _reference_forward(params, x)
    rel_err = float(jnp.max(jnp.abs(logits - ref)) / (jnp.max(jnp.abs(ref)) + 1e-6))
    assert rel_err < 2e-2, f"mismatch vs reference, rel_err={rel_err}"

    print("KERNEL_OK")
</pallas_src>

<mosaic_0001>
module attributes {stable_mosaic.version = 11 : i64} {
  func.func @kernel(%arg0: memref<2x16x16x32xf32, #tpu.memory_space<vmem>>, %arg1: memref<9x1x32xf32, #tpu.memory_space<vmem>>, %arg2: memref<1x32xf32, #tpu.memory_space<vmem>>, %arg3: memref<288x64xf32, #tpu.memory_space<vmem>>, %arg4: memref<1x64xf32, #tpu.memory_space<vmem>>, %arg5: memref<256x128xf32, #tpu.memory_space<vmem>>, %arg6: memref<1x128xf32, #tpu.memory_space<vmem>>, %arg7: memref<128x10xf32, #tpu.memory_space<vmem>>, %arg8: memref<1x10xf32, #tpu.memory_space<vmem>>, %arg9: memref<2x10xf32, #tpu.memory_space<vmem>>, %arg10: memref<2x6x6x32xf32, #tpu.memory_space<vmem>>, %arg11: memref<32x288xf32, #tpu.memory_space<vmem>>, %arg12: memref<2x256xf32, #tpu.memory_space<vmem>>) attributes {dimension_semantics = [], scalar_prefetch = 0 : i64, scratch_operands = 3 : i64, tpu.core_type = #tpu.core_type<tc>} {
    %c0 = arith.constant 0 : index
    %c0_0 = arith.constant 0 : index
    %c0_1 = arith.constant 0 : index
    %0 = vector.load %arg1[%c0, %c0_0, %c0_1] : memref<9x1x32xf32, #tpu.memory_space<vmem>>, vector<9x1x32xf32>
    %c0_2 = arith.constant 0 : index
    %c0_3 = arith.constant 0 : index
    %c0_4 = arith.constant 0 : index
    %c0_5 = arith.constant 0 : index
    %1 = vector.load %arg0[%c0_2, %c0_3, %c0_4, %c0_5] : memref<2x16x16x32xf32, #tpu.memory_space<vmem>>, vector<2x16x14x32xf32>
    %2 = vector.extract_strided_slice %1 {offsets = [0, 0, 0, 0], sizes = [2, 14, 14, 32], strides = [1, 1, 1, 1]} : vector<2x16x14x32xf32> to vector<2x14x14x32xf32>
    %3 = vector.extract_strided_slice %0 {offsets = [0, 0, 0], sizes = [1, 1, 32], strides = [1, 1, 1]} : vector<9x1x32xf32> to vector<1x1x32xf32>
    %4 = vector.shape_cast %3 : vector<1x1x32xf32> to vector<1x32xf32>
    %5 = vector.shape_cast %4 : vector<1x32xf32> to vector<1x1x1x32xf32>
    %6 = vector.broadcast %5 : vector<1x1x1x32xf32> to vector<2x14x14x32xf32>
    %7 = arith.mulf %2, %6 : vector<2x14x14x32xf32>
    %8 = vector.extract_strided_slice %1 {offsets = [0, 1, 0, 0], sizes = [2, 14, 14, 32], strides = [1, 1, 1, 1]} : vector<2x16x14x32xf32> to vector<2x14x14x32xf32>
    %9 = vector.extract_strided_slice %0 {offsets = [3, 0, 0], sizes = [1, 1, 32], strides = [1, 1, 1]} : vector<9x1x32xf32> to vector<1x1x32xf32>
    %10 = vector.shape_cast %9 : vector<1x1x32xf32> to vector<1x32xf32>
    %11 = vector.shape_cast %10 : vector<1x32xf32> to vector<1x1x1x32xf32>
    %12 = vector.broadcast %11 : vector<1x1x1x32xf32> to vector<2x14x14x32xf32>
    %13 = arith.mulf %8, %12 : vector<2x14x14x32xf32>
    %14 = arith.addf %7, %13 : vector<2x14x14x32xf32>
    %15 = vector.extract_strided_slice %1 {offsets = [0, 2, 0, 0], sizes = [2, 14, 14, 32], strides = [1, 1, 1, 1]} : vector<2x16x14x32xf32> to vector<2x14x14x32xf32>
    %16 = vector.extract_strided_slice %0 {offsets = [6, 0, 0], sizes = [1, 1, 32], strides = [1, 1, 1]} : vector<9x1x32xf32> to vector<1x1x32xf32>
    %17 = vector.shape_cast %16 : vector<1x1x32xf32> to vector<1x32xf32>
    %18 = vector.shape_cast %17 : vector<1x32xf32> to vector<1x1x1x32xf32>
    %19 = vector.broadcast %18 : vector<1x1x1x32xf32> to vector<2x14x14x32xf32>
    %20 = arith.mulf %15, %19 : vector<2x14x14x32xf32>
    %21 = arith.addf %14, %20 : vector<2x14x14x32xf32>
    %c0_6 = arith.constant 0 : index
    %c0_7 = arith.constant 0 : index
    %c1 = arith.constant 1 : index
    %c0_8 = arith.constant 0 : index
    %22 = vector.load %arg0[%c0_6, %c0_7, %c1, %c0_8] : memref<2x16x16x32xf32, #tpu.memory_space<vmem>>, vector<2x16x14x32xf32>
    %23 = vector.extract_strided_slice %22 {offsets = [0, 0, 0, 0], sizes = [2, 14, 14, 32], strides = [1, 1, 1, 1]} : vector<2x16x14x32xf32> to vector<2x14x14x32xf32>
    %24 = vector.extract_strided_slice %0 {offsets = [1, 0, 0], sizes = [1, 1, 32], strides = [1, 1, 1]} : vector<9x1x32xf32> to vector<1x1x32xf32>
    %25 = vector.shape_cast %24 : vector<1x1x32xf32> to vector<1x32xf32>
    %26 = vector.shape_cast %25 : vector<1x32xf32> to vector<1x1x1x32xf32>
    %27 = vector.broadcast %26 : vector<1x1x1x32xf32> to vector<2x14x14x32xf32>
    %28 = arith.mulf %23, %27 : vector<2x14x14x32xf32>
    %29 = arith.addf %21, %28 : vector<2x14x14x32xf32>
    %30 = vector.extract_strided_slice %22 {offsets = [0, 1, 0, 0], sizes = [2, 14, 14, 32], strides = [1, 1, 1, 1]} : vector<2x16x14x32xf32> to vector<2x14x14x32xf32>
    %31 = vector.extract_strided_slice %0 {offsets = [4, 0, 0], sizes = [1, 1, 32], strides = [1, 1, 1]} : vector<9x1x32xf32> to vector<1x1x32xf32>
    %32 = vector.shape_cast %31 : vector<1x1x32xf32> to vector<1x32xf32>
    %33 = vector.shape_cast %32 : vector<1x32xf32> to vector<1x1x1x32xf32>
    %34 = vector.broadcast %33 : vector<1x1x1x32xf32> to vector<2x14x14x32xf32>
    %35 = arith.mulf %30, %34 : vector<2x14x14x32xf32>
    %36 = arith.addf %29, %35 : vector<2x14x14x32xf32>
    %37 = vector.extract_strided_slice %22 {offsets = [0, 2, 0, 0], sizes = [2, 14, 14, 32], strides = [1, 1, 1, 1]} : vector<2x16x14x32xf32> to vector<2x14x14x32xf32>
    %38 = vector.extract_strided_slice %0 {offsets = [7, 0, 0], sizes = [1, 1, 32], strides = [1, 1, 1]} : vector<9x1x32xf32> to vector<1x1x32xf32>
    %39 = vector.shape_cast %38 : vector<1x1x32xf32> to vector<1x32xf32>
    %40 = vector.shape_cast %39 : vector<1x32xf32> to vector<1x1x1x32xf32>
    %41 = vector.broadcast %40 : vector<1x1x1x32xf32> to vector<2x14x14x32xf32>
    %42 = arith.mulf %37, %41 : vector<2x14x14x32xf32>
    %43 = arith.addf %36, %42 : vector<2x14x14x32xf32>
    %c0_9 = arith.constant 0 : index
    %c0_10 = arith.constant 0 : index
    %c2 = arith.constant 2 : index
    %c0_11 = arith.constant 0 : index
    %44 = vector.load %arg0[%c0_9, %c0_10, %c2, %c0_11] : memref<2x16x16x32xf32, #tpu.memory_space<vmem>>, vector<2x16x14x32xf32>
    %45 = vector.extract_strided_slice %44 {offsets = [0, 0, 0, 0], sizes = [2, 14, 14, 32], strides = [1, 1, 1, 1]} : vector<2x16x14x32xf32> to vector<2x14x14x32xf32>
    %46 = vector.extract_strided_slice %0 {offsets = [2, 0, 0], sizes = [1, 1, 32], strides = [1, 1, 1]} : vector<9x1x32xf32> to vector<1x1x32xf32>
    %47 = vector.shape_cast %46 : vector<1x1x32xf32> to vector<1x32xf32>
    %48 = vector.shape_cast %47 : vector<1x32xf32> to vector<1x1x1x32xf32>
    %49 = vector.broadcast %48 : vector<1x1x1x32xf32> to vector<2x14x14x32xf32>
    %50 = arith.mulf %45, %49 : vector<2x14x14x32xf32>
    %51 = arith.addf %43, %50 : vector<2x14x14x32xf32>
    %52 = vector.extract_strided_slice %44 {offsets = [0, 1, 0, 0], sizes = [2, 14, 14, 32], strides = [1, 1, 1, 1]} : vector<2x16x14x32xf32> to vector<2x14x14x32xf32>
    %53 = vector.extract_strided_slice %0 {offsets = [5, 0, 0], sizes = [1, 1, 32], strides = [1, 1, 1]} : vector<9x1x32xf32> to vector<1x1x32xf32>
    %54 = vector.shape_cast %53 : vector<1x1x32xf32> to vector<1x32xf32>
    %55 = vector.shape_cast %54 : vector<1x32xf32> to vector<1x1x1x32xf32>
    %56 = vector.broadcast %55 : vector<1x1x1x32xf32> to vector<2x14x14x32xf32>
    %57 = arith.mulf %52, %56 : vector<2x14x14x32xf32>
    %58 = arith.addf %51, %57 : vector<2x14x14x32xf32>
    %59 = vector.extract_strided_slice %44 {offsets = [0, 2, 0, 0], sizes = [2, 14, 14, 32], strides = [1, 1, 1, 1]} : vector<2x16x14x32xf32> to vector<2x14x14x32xf32>
    %60 = vector.extract_strided_slice %0 {offsets = [8, 0, 0], sizes = [1, 1, 32], strides = [1, 1, 1]} : vector<9x1x32xf32> to vector<1x1x32xf32>
    %61 = vector.shape_cast %60 : vector<1x1x32xf32> to vector<1x32xf32>
    %62 = vector.shape_cast %61 : vector<1x32xf32> to vector<1x1x1x32xf32>
    %63 = vector.broadcast %62 : vector<1x1x1x32xf32> to vector<2x14x14x32xf32>
    %64 = arith.mulf %59, %63 : vector<2x14x14x32xf32>
    %65 = arith.addf %58, %64 : vector<2x14x14x32xf32>
    %c0_12 = arith.constant 0 : index
    %c0_13 = arith.constant 0 : index
    %66 = vector.load %arg2[%c0_12, %c0_13] : memref<1x32xf32, #tpu.memory_space<vmem>>, vector<1x32xf32>
    %67 = vector.shape_cast %66 : vector<1x32xf32> to vector<1x1x1x32xf32>
    %68 = vector.broadcast %67 : vector<1x1x1x32xf32> to vector<2x14x14x32xf32>
    %69 = arith.addf %65, %68 : vector<2x14x14x32xf32>
    %cst = arith.constant 0.000000e+00 : f32
    %70 = vector.broadcast %cst : f32 to vector<2x14x14x32xf32>
    %71 = arith.maximumf %69, %70 : vector<2x14x14x32xf32>
    %72 = vector.shape_cast %71 : vector<2x14x14x32xf32> to vector<2x7x2x14x32xf32>
    %73 = vector.extract_strided_slice %72 {offsets = [0, 0, 0, 0, 0], sizes = [2, 7, 1, 14, 32], strides = [1, 1, 1, 1, 1]} : vector<2x7x2x14x32xf32> to vector<2x7x1x14x32xf32>
    %74 = vector.shape_cast %73 : vector<2x7x1x14x32xf32> to vector<2x7x14x32xf32>
    %75 = vector.extract_strided_slice %72 {offsets = [0, 0, 1, 0, 0], sizes = [2, 7, 1, 14, 32], strides = [1, 1, 1, 1, 1]} : vector<2x7x2x14x32xf32> to vector<2x7x1x14x32xf32>
    %76 = vector.shape_cast %75 : vector<2x7x1x14x32xf32> to vector<2x7x14x32xf32>
    %77 = arith.maximumf %74, %76 : vector<2x7x14x32xf32>
    %78 = vector.extract_strided_slice %77 {offsets = [0, 0, 0, 0], sizes = [2, 6, 1, 32], strides = [1, 1, 1, 1]} : vector<2x7x14x32xf32> to vector<2x6x1x32xf32>
    %79 = vector.extract_strided_slice %77 {offsets = [0, 0, 1, 0], sizes = [2, 6, 1, 32], strides = [1, 1, 1, 1]} : vector<2x7x14x32xf32> to vector<2x6x1x32xf32>
    %80 = arith.maximumf %78, %79 : vector<2x6x1x32xf32>
    %c0_14 = arith.constant 0 : index
    %c0_15 = arith.constant 0 : index
    %c0_16 = arith.constant 0 : index
    %c0_17 = arith.constant 0 : index
    %81 = vector.load %arg10[%c0_14, %c0_15, %c0_16, %c0_17] : memref<2x6x6x32xf32, #tpu.memory_space<vmem>>, vector<2x6x1x32xf32>
    tpu.vector_store %arg10[%c0_14, %c0_15, %c0_16, %c0_17], %80 {strides = array<i32>} : memref<2x6x6x32xf32, #tpu.memory_space<vmem>>, vector<2x6x1x32xf32>,
    %82 = vector.extract_strided_slice %77 {offsets = [0, 0, 2, 0], sizes = [2, 6, 1, 32], strides = [1, 1, 1, 1]} : vector<2x7x14x32xf32> to vector<2x6x1x32xf32>
    %83 = vector.extract_strided_slice %77 {offsets = [0, 0, 3, 0], sizes = [2, 6, 1, 32], strides = [1, 1, 1, 1]} : vector<2x7x14x32xf32> to vector<2x6x1x32xf32>
    %84 = arith.maximumf %82, %83 : vector<2x6x1x32xf32>
    %c0_18 = arith.constant 0 : index
    %c0_19 = arith.constant 0 : index
    %c1_20 = arith.constant 1 : index
    %c0_21 = arith.constant 0 : index
    %85 = vector.load %arg10[%c0_18, %c0_19, %c1_20, %c0_21] : memref<2x6x6x32xf32, #tpu.memory_space<vmem>>, vector<2x6x1x32xf32>
    tpu.vector_store %arg10[%c0_18, %c0_19, %c1_20, %c0_21], %84 {strides = array<i32>} : memref<2x6x6x32xf32, #tpu.memory_space<vmem>>, vector<2x6x1x32xf32>,
    %86 = vector.extract_strided_slice %77 {offsets = [0, 0, 4, 0], sizes = [2, 6, 1, 32], strides = [1, 1, 1, 1]} : vector<2x7x14x32xf32> to vector<2x6x1x32xf32>
    %87 = vector.extract_strided_slice %77 {offsets = [0, 0, 5, 0], sizes = [2, 6, 1, 32], strides = [1, 1, 1, 1]} : vector<2x7x14x32xf32> to vector<2x6x1x32xf32>
    %88 = arith.maximumf %86, %87 : vector<2x6x1x32xf32>
    %c0_22 = arith.constant 0 : index
    %c0_23 = arith.constant 0 : index
    %c2_24 = arith.constant 2 : index
    %c0_25 = arith.constant 0 : index
    %89 = vector.load %arg10[%c0_22, %c0_23, %c2_24, %c0_25] : memref<2x6x6x32xf32, #tpu.memory_space<vmem>>, vector<2x6x1x32xf32>
    tpu.vector_store %arg10[%c0_22, %c0_23, %c2_24, %c0_25], %88 {strides = array<i32>} : memref<2x6x6x32xf32, #tpu.memory_space<vmem>>, vector<2x6x1x32xf32>,
    %90 = vector.extract_strided_slice %77 {offsets = [0, 0, 6, 0], sizes = [2, 6, 1, 32], strides = [1, 1, 1, 1]} : vector<2x7x14x32xf32> to vector<2x6x1x32xf32>
    %91 = vector.extract_strided_slice %77 {offsets = [0, 0, 7, 0], sizes = [2, 6, 1, 32], strides = [1, 1, 1, 1]} : vector<2x7x14x32xf32> to vector<2x6x1x32xf32>
    %92 = arith.maximumf %90, %91 : vector<2x6x1x32xf32>
    %c0_26 = arith.constant 0 : index
    %c0_27 = arith.constant 0 : index
    %c3 = arith.constant 3 : index
    %c0_28 = arith.constant 0 : index
    %93 = vector.load %arg10[%c0_26, %c0_27, %c3, %c0_28] : memref<2x6x6x32xf32, #tpu.memory_space<vmem>>, vector<2x6x1x32xf32>
    tpu.vector_store %arg10[%c0_26, %c0_27, %c3, %c0_28], %92 {strides = array<i32>} : memref<2x6x6x32xf32, #tpu.memory_space<vmem>>, vector<2x6x1x32xf32>,
    %94 = vector.extract_strided_slice %77 {offsets = [0, 0, 8, 0], sizes = [2, 6, 1, 32], strides = [1, 1, 1, 1]} : vector<2x7x14x32xf32> to vector<2x6x1x32xf32>
    %95 = vector.extract_strided_slice %77 {offsets = [0, 0, 9, 0], sizes = [2, 6, 1, 32], strides = [1, 1, 1, 1]} : vector<2x7x14x32xf32> to vector<2x6x1x32xf32>
    %96 = arith.maximumf %94, %95 : vector<2x6x1x32xf32>
    %c0_29 = arith.constant 0 : index
    %c0_30 = arith.constant 0 : index
    %c4 = arith.constant 4 : index
    %c0_31 = arith.constant 0 : index
    %97 = vector.load %arg10[%c0_29, %c0_30, %c4, %c0_31] : memref<2x6x6x32xf32, #tpu.memory_space<vmem>>, vector<2x6x1x32xf32>
    tpu.vector_store %arg10[%c0_29, %c0_30, %c4, %c0_31], %96 {strides = array<i32>} : memref<2x6x6x32xf32, #tpu.memory_space<vmem>>, vector<2x6x1x32xf32>,
    %98 = vector.extract_strided_slice %77 {offsets = [0, 0, 10, 0], sizes = [2, 6, 1, 32], strides = [1, 1, 1, 1]} : vector<2x7x14x32xf32> to vector<2x6x1x32xf32>
    %99 = vector.extract_strided_slice %77 {offsets = [0, 0, 11, 0], sizes = [2, 6, 1, 32], strides = [1, 1, 1, 1]} : vector<2x7x14x32xf32> to vector<2x6x1x32xf32>
    %100 = arith.maximumf %98, %99 : vector<2x6x1x32xf32>
    %c0_32 = arith.constant 0 : index
    %c0_33 = arith.constant 0 : index
    %c5 = arith.constant 5 : index
    %c0_34 = arith.constant 0 : index
    %101 = vector.load %arg10[%c0_32, %c0_33, %c5, %c0_34] : memref<2x6x6x32xf32, #tpu.memory_space<vmem>>, vector<2x6x1x32xf32>
    tpu.vector_store %arg10[%c0_32, %c0_33, %c5, %c0_34], %100 {strides = array<i32>} : memref<2x6x6x32xf32, #tpu.memory_space<vmem>>, vector<2x6x1x32xf32>,
    %c0_35 = arith.constant 0 : index
    %c0_36 = arith.constant 0 : index
    %c0_37 = arith.constant 0 : index
    %c0_38 = arith.constant 0 : index
    %102 = vector.load %arg10[%c0_35, %c0_36, %c0_37, %c0_38] : memref<2x6x6x32xf32, #tpu.memory_space<vmem>>, vector<1x1x6x32xf32>
    %103 = vector.shape_cast %102 : vector<1x1x6x32xf32> to vector<6x32xf32>
    %c0_39 = arith.constant 0 : index
    %c1_40 = arith.constant 1 : index
    %c0_41 = arith.constant 0 : index
    %c0_42 = arith.constant 0 : index
    %104 = vector.load %arg10[%c0_39, %c1_40, %c0_41, %c0_42] : memref<2x6x6x32xf32, #tpu.memory_space<vmem>>, vector<1x1x6x32xf32>
    %105 = vector.shape_cast %104 : vector<1x1x6x32xf32> to vector<6x32xf32>
    %c0_43 = arith.constant 0 : index
    %c2_44 = arith.constant 2 : index
    %c0_45 = arith.constant 0 : index
    %c0_46 = arith.constant 0 : index
    %106 = vector.load %arg10[%c0_43, %c2_44, %c0_45, %c0_46] : memref<2x6x6x32xf32, #tpu.memory_space<vmem>>, vector<1x1x6x32xf32>
    %107 = vector.shape_cast %106 : vector<1x1x6x32xf32> to vector<6x32xf32>
    %c0_47 = arith.constant 0 : index
    %c3_48 = arith.constant 3 : index
    %c0_49 = arith.constant 0 : index
    %c0_50 = arith.constant 0 : index
    %108 = vector.load %arg10[%c0_47, %c3_48, %c0_49, %c0_50] : memref<2x6x6x32xf32, #tpu.memory_space<vmem>>, vector<1x1x6x32xf32>
    %109 = vector.shape_cast %108 : vector<1x1x6x32xf32> to vector<6x32xf32>
    %c0_51 = arith.constant 0 : index
    %c4_52 = arith.constant 4 : index
    %c0_53 = arith.constant 0 : index
    %c0_54 = arith.constant 0 : index
    %110 = vector.load %arg10[%c0_51, %c4_52, %c0_53, %c0_54] : memref<2x6x6x32xf32, #tpu.memory_space<vmem>>, vector<1x1x6x32xf32>
    %111 = vector.shape_cast %110 : vector<1x1x6x32xf32> to vector<6x32xf32>
    %c0_55 = arith.constant 0 : index
    %c5_56 = arith.constant 5 : index
    %c0_57 = arith.constant 0 : index
    %c0_58 = arith.constant 0 : index
    %112 = vector.load %arg10[%c0_55, %c5_56, %c0_57, %c0_58] : memref<2x6x6x32xf32, #tpu.memory_space<vmem>>, vector<1x1x6x32xf32>
    %113 = vector.shape_cast %112 : vector<1x1x6x32xf32> to vector<6x32xf32>
    %114 = vector.extract_strided_slice %103 {offsets = [0, 0], sizes = [4, 32], strides = [1, 1]} : vector<6x32xf32> to vector<4x32xf32>
    %115 = vector.extract_strided_slice %103 {offsets = [1, 0], sizes = [4, 32], strides = [1, 1]} : vector<6x32xf32> to vector<4x32xf32>
    %116 = vector.extract_strided_slice %103 {offsets = [2, 0], sizes = [4, 32], strides = [1, 1]} : vector<6x32xf32> to vector<4x32xf32>
    %117 = vector.extract_strided_slice %105 {offsets = [0, 0], sizes = [4, 32], strides = [1, 1]} : vector<6x32xf32> to vector<4x32xf32>
    %118 = vector.extract_strided_slice %105 {offsets = [1, 0], sizes = [4, 32], strides = [1, 1]} : vector<6x32xf32> to vector<4x32xf32>
    %119 = vector.extract_strided_slice %105 {offsets = [2, 0], sizes = [4, 32], strides = [1, 1]} : vector<6x32xf32> to vector<4x32xf32>
    %120 = vector.extract_strided_slice %107 {offsets = [0, 0], sizes = [4, 32], strides = [1, 1]} : vector<6x32xf32> to vector<4x32xf32>
    %121 = vector.extract_strided_slice %107 {offsets = [1, 0], sizes = [4, 32], strides = [1, 1]} : vector<6x32xf32> to vector<4x32xf32>
    %122 = vector.extract_strided_slice %107 {offsets = [2, 0], sizes = [4, 32], strides = [1, 1]} : vector<6x32xf32> to vector<4x32xf32>
    %123 = tpu.concatenate %114, %115, %116, %117, %118, %119, %120, %121, %122 in 1 : vector<4x32xf32>, vector<4x32xf32>, vector<4x32xf32>, vector<4x32xf32>, vector<4x32xf32>, vector<4x32xf32>, vector<4x32xf32>, vector<4x32xf32>, vector<4x32xf32> -> vector<4x288xf32>
    %c0_59 = arith.constant 0 : index
    %c0_60 = arith.constant 0 : index
    %124 = vector.load %arg11[%c0_59, %c0_60] : memref<32x288xf32, #tpu.memory_space<vmem>>, vector<4x288xf32>
    tpu.vector_store %arg11[%c0_59, %c0_60], %123 {strides = array<i32>} : memref<32x288xf32, #tpu.memory_space<vmem>>, vector<4x288xf32>,
    %125 = vector.extract_strided_slice %105 {offsets = [0, 0], sizes = [4, 32], strides = [1, 1]} : vector<6x32xf32> to vector<4x32xf32>
    %126 = vector.extract_strided_slice %105 {offsets = [1, 0], sizes = [4, 32], strides = [1, 1]} : vector<6x32xf32> to vector<4x32xf32>
    %127 = vector.extract_strided_slice %105 {offsets = [2, 0], sizes = [4, 32], strides = [1, 1]} : vector<6x32xf32> to vector<4x32xf32>
    %128 = vector.extract_strided_slice %107 {offsets = [0, 0], sizes = [4, 32], strides = [1, 1]} : vector<6x32xf32> to vector<4x32xf32>
    %129 = vector.extract_strided_slice %107 {offsets = [1, 0], sizes = [4, 32], strides = [1, 1]} : vector<6x32xf32> to vector<4x32xf32>
    %130 = vector.extract_strided_slice %107 {offsets = [2, 0], sizes = [4, 32], strides = [1, 1]} : vector<6x32xf32> to vector<4x32xf32>
    %131 = vector.extract_strided_slice %109 {offsets = [0, 0], sizes = [4, 32], strides = [1, 1]} : vector<6x32xf32> to vector<4x32xf32>
    %132 = vector.extract_strided_slice %109 {offsets = [1, 0], sizes = [4, 32], strides = [1, 1]} : vector<6x32xf32> to vector<4x32xf32>
    %133 = vector.extract_strided_slice %109 {offsets = [2, 0], sizes = [4, 32], strides = [1, 1]} : vector<6x32xf32> to vector<4x32xf32>
    %134 = tpu.concatenate %125, %126, %127, %128, %129, %130, %131, %132, %133 in 1 : vector<4x32xf32>, vector<4x32xf32>, vector<4x32xf32>, vector<4x32xf32>, vector<4x32xf32>, vector<4x32xf32>, vector<4x32xf32>, vector<4x32xf32>, vector<4x32xf32> -> vector<4x288xf32>
    %c4_61 = arith.constant 4 : index
    %c0_62 = arith.constant 0 : index
    %135 = vector.load %arg11[%c4_61, %c0_62] : memref<32x288xf32, #tpu.memory_space<vmem>>, vector<4x288xf32>
    tpu.vector_store %arg11[%c4_61, %c0_62], %134 {strides = array<i32>} : memref<32x288xf32, #tpu.memory_space<vmem>>, vector<4x288xf32>,
    %136 = vector.extract_strided_slice %107 {offsets = [0, 0], sizes = [4, 32], strides = [1, 1]} : vector<6x32xf32> to vector<4x32xf32>
    %137 = vector.extract_strided_slice %107 {offsets = [1, 0], sizes = [4, 32], strides = [1, 1]} : vector<6x32xf32> to vector<4x32xf32>
    %138 = vector.extract_strided_slice %107 {offsets = [2, 0], sizes = [4, 32], strides = [1, 1]} : vector<6x32xf32> to vector<4x32xf32>
    %139 = vector.extract_strided_slice %109 {offsets = [0, 0], sizes = [4, 32], strides = [1, 1]} : vector<6x32xf32> to vector<4x32xf32>
    %140 = vector.extract_strided_slice %109 {offsets = [1, 0], sizes = [4, 32], strides = [1, 1]} : vector<6x32xf32> to vector<4x32xf32>
    %141 = vector.extract_strided_slice %109 {offsets = [2, 0], sizes = [4, 32], strides = [1, 1]} : vector<6x32xf32> to vector<4x32xf32>
    %142 = vector.extract_strided_slice %111 {offsets = [0, 0], sizes = [4, 32], strides = [1, 1]} : vector<6x32xf32> to vector<4x32xf32>
    %143 = vector.extract_strided_slice %111 {offsets = [1, 0], sizes = [4, 32], strides = [1, 1]} : vector<6x32xf32> to vector<4x32xf32>
    %144 = vector.extract_strided_slice %111 {offsets = [2, 0], sizes = [4, 32], strides = [1, 1]} : vector<6x32xf32> to vector<4x32xf32>
    %145 = tpu.concatenate %136, %137, %138, %139, %140, %141, %142, %143, %144 in 1 : vector<4x32xf32>, vector<4x32xf32>, vector<4x32xf32>, vector<4x32xf32>, vector<4x32xf32>, vector<4x32xf32>, vector<4x32xf32>, vector<4x32xf32>, vector<4x32xf32> -> vector<4x288xf32>
    %c8 = arith.constant 8 : index
    %c0_63 = arith.constant 0 : index
    %146 = vector.load %arg11[%c8, %c0_63] : memref<32x288xf32, #tpu.memory_space<vmem>>, vector<4x288xf32>
    tpu.vector_store %arg11[%c8, %c0_63], %145 {strides = array<i32>} : memref<32x288xf32, #tpu.memory_space<vmem>>, vector<4x288xf32>,
    %147 = vector.extract_strided_slice %109 {offsets = [0, 0], sizes = [4, 32], strides = [1, 1]} : vector<6x32xf32> to vector<4x32xf32>
    %148 = vector.extract_strided_slice %109 {offsets = [1, 0], sizes = [4, 32], strides = [1, 1]} : vector<6x32xf32> to vector<4x32xf32>
    %149 = vector.extract_strided_slice %109 {offsets = [2, 0], sizes = [4, 32], strides = [1, 1]} : vector<6x32xf32> to vector<4x32xf32>
    %150 = vector.extract_strided_slice %111 {offsets = [0, 0], sizes = [4, 32], strides = [1, 1]} : vector<6x32xf32> to vector<4x32xf32>
    %151 = vector.extract_strided_slice %111 {offsets = [1, 0], sizes = [4, 32], strides = [1, 1]} : vector<6x32xf32> to vector<4x32xf32>
    %152 = vector.extract_strided_slice %111 {offsets = [2, 0], sizes = [4, 32], strides = [1, 1]} : vector<6x32xf32> to vector<4x32xf32>
    %153 = vector.extract_strided_slice %113 {offsets = [0, 0], sizes = [4, 32], strides = [1, 1]} : vector<6x32xf32> to vector<4x32xf32>
    %154 = vector.extract_strided_slice %113 {offsets = [1, 0], sizes = [4, 32], strides = [1, 1]} : vector<6x32xf32> to vector<4x32xf32>
    %155 = vector.extract_strided_slice %113 {offsets = [2, 0], sizes = [4, 32], strides = [1, 1]} : vector<6x32xf32> to vector<4x32xf32>
    %156 = tpu.concatenate %147, %148, %149, %150, %151, %152, %153, %154, %155 in 1 : vector<4x32xf32>, vector<4x32xf32>, vector<4x32xf32>, vector<4x32xf32>, vector<4x32xf32>, vector<4x32xf32>, vector<4x32xf32>, vector<4x32xf32>, vector<4x32xf32> -> vector<4x288xf32>
    %c12 = arith.constant 12 : index
    %c0_64 = arith.constant 0 : index
    %157 = vector.load %arg11[%c12, %c0_64] : memref<32x288xf32, #tpu.memory_space<vmem>>, vector<4x288xf32>
    tpu.vector_store %arg11[%c12, %c0_64], %156 {strides = array<i32>} : memref<32x288xf32, #tpu.memory_space<vmem>>, vector<4x288xf32>,
    %c1_65 = arith.constant 1 : index
    %c0_66 = arith.constant 0 : index
    %c0_67 = arith.constant 0 : index
    %c0_68 = arith.constant 0 : index
    %158 = vector.load %arg10[%c1_65, %c0_66, %c0_67, %c0_68] : memref<2x6x6x32xf32, #tpu.memory_space<vmem>>, vector<1x1x6x32xf32>
    %159 = vector.shape_cast %158 : vector<1x1x6x32xf32> to vector<6x32xf32>
    %c1_69 = arith.constant 1 : index
    %c1_70 = arith.constant 1 : index
    %c0_71 = arith.constant 0 : index
    %c0_72 = arith.constant 0 : index
    %160 = vector.load %arg10[%c1_69, %c1_70, %c0_71, %c0_72] : memref<2x6x6x32xf32, #tpu.memory_space<vmem>>, vector<1x1x6x32xf32>
    %161 = vector.shape_cast %160 : vector<1x1x6x32xf32> to vector<6x32xf32>
    %c1_73 = arith.constant 1 : index
    %c2_74 = arith.constant 2 : index
    %c0_75 = arith.constant 0 : index
    %c0_76 = arith.constant 0 : index
    %162 = vector.load %arg10[%c1_73, %c2_74, %c0_75, %c0_76] : memref<2x6x6x32xf32, #tpu.memory_space<vmem>>, vector<1x1x6x32xf32>
    %163 = vector.shape_cast %162 : vector<1x1x6x32xf32> to vector<6x32xf32>
    %c1_77 = arith.constant 1 : index
    %c3_78 = arith.constant 3 : index
    %c0_79 = arith.constant 0 : index
    %c0_80 = arith.constant 0 : index
    %164 = vector.load %arg10[%c1_77, %c3_78, %c0_79, %c0_80] : memref<2x6x6x32xf32, #tpu.memory_space<vmem>>, vector<1x1x6x32xf32>
    %165 = vector.shape_cast %164 : vector<1x1x6x32xf32> to vector<6x32xf32>
    %c1_81 = arith.constant 1 : index
    %c4_82 = arith.constant 4 : index
    %c0_83 = arith.constant 0 : index
    %c0_84 = arith.constant 0 : index
    %166 = vector.load %arg10[%c1_81, %c4_82, %c0_83, %c0_84] : memref<2x6x6x32xf32, #tpu.memory_space<vmem>>, vector<1x1x6x32xf32>
    %167 = vector.shape_cast %166 : vector<1x1x6x32xf32> to vector<6x32xf32>
    %c1_85 = arith.constant 1 : index
    %c5_86 = arith.constant 5 : index
    %c0_87 = arith.constant 0 : index
    %c0_88 = arith.constant 0 : index
    %168 = vector.load %arg10[%c1_85, %c5_86, %c0_87, %c0_88] : memref<2x6x6x32xf32, #tpu.memory_space<vmem>>, vector<1x1x6x32xf32>
    %169 = vector.shape_cast %168 : vector<1x1x6x32xf32> to vector<6x32xf32>
    %170 = vector.extract_strided_slice %159 {offsets = [0, 0], sizes = [4, 32], strides = [1, 1]} : vector<6x32xf32> to vector<4x32xf32>
    %171 = vector.extract_strided_slice %159 {offsets = [1, 0], sizes = [4, 32], strides = [1, 1]} : vector<6x32xf32> to vector<4x32xf32>
    %172 = vector.extract_strided_slice %159 {offsets = [2, 0], sizes = [4, 32], strides = [1, 1]} : vector<6x32xf32> to vector<4x32xf32>
    %173 = vector.extract_strided_slice %161 {offsets = [0, 0], sizes = [4, 32], strides = [1, 1]} : vector<6x32xf32> to vector<4x32xf32>
    %174 = vector.extract_strided_slice %161 {offsets = [1, 0], sizes = [4, 32], strides = [1, 1]} : vector<6x32xf32> to vector<4x32xf32>
    %175 = vector.extract_strided_slice %161 {offsets = [2, 0], sizes = [4, 32], strides = [1, 1]} : vector<6x32xf32> to vector<4x32xf32>
    %176 = vector.extract_strided_slice %163 {offsets = [0, 0], sizes = [4, 32], strides = [1, 1]} : vector<6x32xf32> to vector<4x32xf32>
    %177 = vector.extract_strided_slice %163 {offsets = [1, 0], sizes = [4, 32], strides = [1, 1]} : vector<6x32xf32> to vector<4x32xf32>
    %178 = vector.extract_strided_slice %163 {offsets = [2, 0], sizes = [4, 32], strides = [1, 1]} : vector<6x32xf32> to vector<4x32xf32>
    %179 = tpu.concatenate %170, %171, %172, %173, %174, %175, %176, %177, %178 in 1 : vector<4x32xf32>, vector<4x32xf32>, vector<4x32xf32>, vector<4x32xf32>, vector<4x32xf32>, vector<4x32xf32>, vector<4x32xf32>, vector<4x32xf32>, vector<4x32xf32> -> vector<4x288xf32>
    %c16 = arith.constant 16 : index
    %c0_89 = arith.constant 0 : index
    %180 = vector.load %arg11[%c16, %c0_89] : memref<32x288xf32, #tpu.memory_space<vmem>>, vector<4x288xf32>
    tpu.vector_store %arg11[%c16, %c0_89], %179 {strides = array<i32>} : memref<32x288xf32, #tpu.memory_space<vmem>>, vector<4x288xf32>,
    %181 = vector.extract_strided_slice %161 {offsets = [0, 0], sizes = [4, 32], strides = [1, 1]} : vector<6x32xf32> to vector<4x32xf32>
    %182 = vector.extract_strided_slice %161 {offsets = [1, 0], sizes = [4, 32], strides = [1, 1]} : vector<6x32xf32> to vector<4x32xf32>
    %183 = vector.extract_strided_slice %161 {offsets = [2, 0], sizes = [4, 32], strides = [1, 1]} : vector<6x32xf32> to vector<4x32xf32>
    %184 = vector.extract_strided_slice %163 {offsets = [0, 0], sizes = [4, 32], strides = [1, 1]} : vector<6x32xf32> to vector<4x32xf32>
    %185 = vector.extract_strided_slice %163 {offsets = [1, 0], sizes = [4, 32], strides = [1, 1]} : vector<6x32xf32> to vector<4x32xf32>
    %186 = vector.extract_strided_slice %163 {offsets = [2, 0], sizes = [4, 32], strides = [1, 1]} : vector<6x32xf32> to vector<4x32xf32>
    %187 = vector.extract_strided_slice %165 {offsets = [0, 0], sizes = [4, 32], strides = [1, 1]} : vector<6x32xf32> to vector<4x32xf32>
    %188 = vector.extract_strided_slice %165 {offsets = [1, 0], sizes = [4, 32], strides = [1, 1]} : vector<6x32xf32> to vector<4x32xf32>
    %189 = vector.extract_strided_slice %165 {offsets = [2, 0], sizes = [4, 32], strides = [1, 1]} : vector<6x32xf32> to vector<4x32xf32>
    %190 = tpu.concatenate %181, %182, %183, %184, %185, %186, %187, %188, %189 in 1 : vector<4x32xf32>, vector<4x32xf32>, vector<4x32xf32>, vector<4x32xf32>, vector<4x32xf32>, vector<4x32xf32>, vector<4x32xf32>, vector<4x32xf32>, vector<4x32xf32> -> vector<4x288xf32>
    %c20 = arith.constant 20 : index
    %c0_90 = arith.constant 0 : index
    %191 = vector.load %arg11[%c20, %c0_90] : memref<32x288xf32, #tpu.memory_space<vmem>>, vector<4x288xf32>
    tpu.vector_store %arg11[%c20, %c0_90], %190 {strides = array<i32>} : memref<32x288xf32, #tpu.memory_space<vmem>>, vector<4x288xf32>,
    %192 = vector.extract_strided_slice %163 {offsets = [0, 0], sizes = [4, 32], strides = [1, 1]} : vector<6x32xf32> to vector<4x32xf32>
    %193 = vector.extract_strided_slice %163 {offsets = [1, 0], sizes = [4, 32], strides = [1, 1]} : vector<6x32xf32> to vector<4x32xf32>
    %194 = vector.extract_strided_slice %163 {offsets = [2, 0], sizes = [4, 32], strides = [1, 1]} : vector<6x32xf32> to vector<4x32xf32>
    %195 = vector.extract_strided_slice %165 {offsets = [0, 0], sizes = [4, 32], strides = [1, 1]} : vector<6x32xf32> to vector<4x32xf32>
    %196 = vector.extract_strided_slice %165 {offsets = [1, 0], sizes = [4, 32], strides = [1, 1]} : vector<6x32xf32> to vector<4x32xf32>
    %197 = vector.extract_strided_slice %165 {offsets = [2, 0], sizes = [4, 32], strides = [1, 1]} : vector<6x32xf32> to vector<4x32xf32>
    %198 = vector.extract_strided_slice %167 {offsets = [0, 0], sizes = [4, 32], strides = [1, 1]} : vector<6x32xf32> to vector<4x32xf32>
    %199 = vector.extract_strided_slice %167 {offsets = [1, 0], sizes = [4, 32], strides = [1, 1]} : vector<6x32xf32> to vector<4x32xf32>
    %200 = vector.extract_strided_slice %167 {offsets = [2, 0], sizes = [4, 32], strides = [1, 1]} : vector<6x32xf32> to vector<4x32xf32>
    %201 = tpu.concatenate %192, %193, %194, %195, %196, %197, %198, %199, %200 in 1 : vector<4x32xf32>, vector<4x32xf32>, vector<4x32xf32>, vector<4x32xf32>, vector<4x32xf32>, vector<4x32xf32>, vector<4x32xf32>, vector<4x32xf32>, vector<4x32xf32> -> vector<4x288xf32>
    %c24 = arith.constant 24 : index
    %c0_91 = arith.constant 0 : index
    %202 = vector.load %arg11[%c24, %c0_91] : memref<32x288xf32, #tpu.memory_space<vmem>>, vector<4x288xf32>
    tpu.vector_store %arg11[%c24, %c0_91], %201 {strides = array<i32>} : memref<32x288xf32, #tpu.memory_space<vmem>>, vector<4x288xf32>,
    %203 = vector.extract_strided_slice %165 {offsets = [0, 0], sizes = [4, 32], strides = [1, 1]} : vector<6x32xf32> to vector<4x32xf32>
    %204 = vector.extract_strided_slice %165 {offsets = [1, 0], sizes = [4, 32], strides = [1, 1]} : vector<6x32xf32> to vector<4x32xf32>
    %205 = vector.extract_strided_slice %165 {offsets = [2, 0], sizes = [4, 32], strides = [1, 1]} : vector<6x32xf32> to vector<4x32xf32>
    %206 = vector.extract_strided_slice %167 {offsets = [0, 0], sizes = [4, 32], strides = [1, 1]} : vector<6x32xf32> to vector<4x32xf32>
    %207 = vector.extract_strided_slice %167 {offsets = [1, 0], sizes = [4, 32], strides = [1, 1]} : vector<6x32xf32> to vector<4x32xf32>
    %208 = vector.extract_strided_slice %167 {offsets = [2, 0], sizes = [4, 32], strides = [1, 1]} : vector<6x32xf32> to vector<4x32xf32>
    %209 = vector.extract_strided_slice %169 {offsets = [0, 0], sizes = [4, 32], strides = [1, 1]} : vector<6x32xf32> to vector<4x32xf32>
    %210 = vector.extract_strided_slice %169 {offsets = [1, 0], sizes = [4, 32], strides = [1, 1]} : vector<6x32xf32> to vector<4x32xf32>
    %211 = vector.extract_strided_slice %169 {offsets = [2, 0], sizes = [4, 32], strides = [1, 1]} : vector<6x32xf32> to vector<4x32xf32>
    %212 = tpu.concatenate %203, %204, %205, %206, %207, %208, %209, %210, %211 in 1 : vector<4x32xf32>, vector<4x32xf32>, vector<4x32xf32>, vector<4x32xf32>, vector<4x32xf32>, vector<4x32xf32>, vector<4x32xf32>, vector<4x32xf32>, vector<4x32xf32> -> vector<4x288xf32>
    %c28 = arith.constant 28 : index
    %c0_92 = arith.constant 0 : index
    %213 = vector.load %arg11[%c28, %c0_92] : memref<32x288xf32, #tpu.memory_space<vmem>>, vector<4x288xf32>
    tpu.vector_store %arg11[%c28, %c0_92], %212 {strides = array<i32>} : memref<32x288xf32, #tpu.memory_space<vmem>>, vector<4x288xf32>,
    %c0_93 = arith.constant 0 : index
    %c0_94 = arith.constant 0 : index
    %214 = vector.load %arg11[%c0_93, %c0_94] : memref<32x288xf32, #tpu.memory_space<vmem>>, vector<32x288xf32>
    %c0_95 = arith.constant 0 : index
    %c0_96 = arith.constant 0 : index
    %215 = vector.load %arg3[%c0_95, %c0_96] : memref<288x64xf32, #tpu.memory_space<vmem>>, vector<288x64xf32>
    %cst_97 = arith.constant dense<0.000000e+00> : vector<32x64xf32>
    %216 = tpu.matmul %214, %215, %cst_97 {dimension_numbers = #tpu.dot_dimension_numbers<[1], [0], [0], [1], [0, 0, 1, 1], [], []>} : vector<32x288xf32>, vector<288x64xf32>, vector<32x64xf32> -> vector<32x64xf32>
    %c0_98 = arith.constant 0 : index
    %c0_99 = arith.constant 0 : index
    %217 = vector.load %arg4[%c0_98, %c0_99] : memref<1x64xf32, #tpu.memory_space<vmem>>, vector<1x64xf32>
    %218 = vector.broadcast %217 : vector<1x64xf32> to vector<32x64xf32>
    %219 = arith.addf %216, %218 : vector<32x64xf32>
    %cst_100 = arith.constant 0.000000e+00 : f32
    %220 = vector.broadcast %cst_100 : f32 to vector<32x64xf32>
    %221 = arith.maximumf %219, %220 : vector<32x64xf32>
    %222 = vector.extract_strided_slice %221 {offsets = [0, 0], sizes = [31, 64], strides = [1, 1]} : vector<32x64xf32> to vector<31x64xf32>
    %223 = vector.extract_strided_slice %221 {offsets = [1, 0], sizes = [31, 64], strides = [1, 1]} : vector<32x64xf32> to vector<31x64xf32>
    %224 = arith.maximumf %222, %223 : vector<31x64xf32>
    %225 = vector.extract_strided_slice %224 {offsets = [0, 0], sizes = [27, 64], strides = [1, 1]} : vector<31x64xf32> to vector<27x64xf32>
    %226 = vector.extract_strided_slice %224 {offsets = [4, 0], sizes = [27, 64], strides = [1, 1]} : vector<31x64xf32> to vector<27x64xf32>
    %227 = arith.maximumf %225, %226 : vector<27x64xf32>
    %228 = vector.extract_strided_slice %227 {offsets = [0, 0], sizes = [1, 64], strides = [1, 1]} : vector<27x64xf32> to vector<1x64xf32>
    %c0_101 = arith.constant 0 : index
    %c0_102 = arith.constant 0 : index
    %229 = vector.load %arg12[%c0_101, %c0_102] : memref<2x256xf32, #tpu.memory_space<vmem>>, vector<1x64xf32>
    tpu.vector_store %arg12[%c0_101, %c0_102], %228 {strides = array<i32>} : memref<2x256xf32, #tpu.memory_space<vmem>>, vector<1x64xf32>,
    %230 = vector.extract_strided_slice %227 {offsets = [2, 0], sizes = [1, 64], strides = [1, 1]} : vector<27x64xf32> to vector<1x64xf32>
    %c0_103 = arith.constant 0 : index
    %c64 = arith.constant 64 : index
    %231 = vector.load %arg12[%c0_103, %c64] : memref<2x256xf32, #tpu.memory_space<vmem>>, vector<1x64xf32>
    tpu.vector_store %arg12[%c0_103, %c64], %230 {strides = array<i32>} : memref<2x256xf32, #tpu.memory_space<vmem>>, vector<1x64xf32>,
    %232 = vector.extract_strided_slice %227 {offsets = [8, 0], sizes = [1, 64], strides = [1, 1]} : vector<27x64xf32> to vector<1x64xf32>
    %c0_104 = arith.constant 0 : index
    %c128 = arith.constant 128 : index
    %233 = vector.load %arg12[%c0_104, %c128] : memref<2x256xf32, #tpu.memory_space<vmem>>, vector<1x64xf32>
    tpu.vector_store %arg12[%c0_104, %c128], %232 {strides = array<i32>} : memref<2x256xf32, #tpu.memory_space<vmem>>, vector<1x64xf32>,
    %234 = vector.extract_strided_slice %227 {offsets = [10, 0], sizes = [1, 64], strides = [1, 1]} : vector<27x64xf32> to vector<1x64xf32>
    %c0_105 = arith.constant 0 : index
    %c192 = arith.constant 192 : index
    %235 = vector.load %arg12[%c0_105, %c192] : memref<2x256xf32, #tpu.memory_space<vmem>>, vector<1x64xf32>
    tpu.vector_store %arg12[%c0_105, %c192], %234 {strides = array<i32>} : memref<2x256xf32, #tpu.memory_space<vmem>>, vector<1x64xf32>,
    %236 = vector.extract_strided_slice %227 {offsets = [16, 0], sizes = [1, 64], strides = [1, 1]} : vector<27x64xf32> to vector<1x64xf32>
    %c1_106 = arith.constant 1 : index
    %c0_107 = arith.constant 0 : index
    %237 = vector.load %arg12[%c1_106, %c0_107] : memref<2x256xf32, #tpu.memory_space<vmem>>, vector<1x64xf32>
    tpu.vector_store %arg12[%c1_106, %c0_107], %236 {strides = array<i32>} : memref<2x256xf32, #tpu.memory_space<vmem>>, vector<1x64xf32>,
    %238 = vector.extract_strided_slice %227 {offsets = [18, 0], sizes = [1, 64], strides = [1, 1]} : vector<27x64xf32> to vector<1x64xf32>
    %c1_108 = arith.constant 1 : index
    %c64_109 = arith.constant 64 : index
    %239 = vector.load %arg12[%c1_108, %c64_109] : memref<2x256xf32, #tpu.memory_space<vmem>>, vector<1x64xf32>
    tpu.vector_store %arg12[%c1_108, %c64_109], %238 {strides = array<i32>} : memref<2x256xf32, #tpu.memory_space<vmem>>, vector<1x64xf32>,
    %240 = vector.extract_strided_slice %227 {offsets = [24, 0], sizes = [1, 64], strides = [1, 1]} : vector<27x64xf32> to vector<1x64xf32>
    %c1_110 = arith.constant 1 : index
    %c128_111 = arith.constant 128 : index
    %241 = vector.load %arg12[%c1_110, %c128_111] : memref<2x256xf32, #tpu.memory_space<vmem>>, vector<1x64xf32>
    tpu.vector_store %arg12[%c1_110, %c128_111], %240 {strides = array<i32>} : memref<2x256xf32, #tpu.memory_space<vmem>>, vector<1x64xf32>,
    %242 = vector.extract_strided_slice %227 {offsets = [26, 0], sizes = [1, 64], strides = [1, 1]} : vector<27x64xf32> to vector<1x64xf32>
    %c1_112 = arith.constant 1 : index
    %c192_113 = arith.constant 192 : index
    %243 = vector.load %arg12[%c1_112, %c192_113] : memref<2x256xf32, #tpu.memory_space<vmem>>, vector<1x64xf32>
    tpu.vector_store %arg12[%c1_112, %c192_113], %242 {strides = array<i32>} : memref<2x256xf32, #tpu.memory_space<vmem>>, vector<1x64xf32>,
    %c0_114 = arith.constant 0 : index
    %c0_115 = arith.constant 0 : index
    %244 = vector.load %arg12[%c0_114, %c0_115] : memref<2x256xf32, #tpu.memory_space<vmem>>, vector<2x256xf32>
    %c0_116 = arith.constant 0 : index
    %c0_117 = arith.constant 0 : index
    %245 = vector.load %arg5[%c0_116, %c0_117] : memref<256x128xf32, #tpu.memory_space<vmem>>, vector<256x128xf32>
    %cst_118 = arith.constant dense<0.000000e+00> : vector<2x128xf32>
    %246 = tpu.matmul %244, %245, %cst_118 {dimension_numbers = #tpu.dot_dimension_numbers<[1], [0], [0], [1], [0, 0, 1, 1], [], []>} : vector<2x256xf32>, vector<256x128xf32>, vector<2x128xf32> -> vector<2x128xf32>
    %c0_119 = arith.constant 0 : index
    %c0_120 = arith.constant 0 : index
    %247 = vector.load %arg6[%c0_119, %c0_120] : memref<1x128xf32, #tpu.memory_space<vmem>>, vector<1x128xf32>
    %248 = vector.broadcast %247 : vector<1x128xf32> to vector<2x128xf32>
    %249 = arith.addf %246, %248 : vector<2x128xf32>
    %cst_121 = arith.constant 0.000000e+00 : f32
    %250 = vector.broadcast %cst_121 : f32 to vector<2x128xf32>
    %251 = arith.maximumf %249, %250 : vector<2x128xf32>
    %c0_122 = arith.constant 0 : index
    %c0_123 = arith.constant 0 : index
    %252 = vector.load %arg7[%c0_122, %c0_123] : memref<128x10xf32, #tpu.memory_space<vmem>>, vector<128x10xf32>
    %cst_124 = arith.constant dense<0.000000e+00> : vector<2x10xf32>
    %253 = tpu.matmul %251, %252, %cst_124 {dimension_numbers = #tpu.dot_dimension_numbers<[1], [0], [0], [1], [0, 0, 1, 1], [], []>} : vector<2x128xf32>, vector<128x10xf32>, vector<2x10xf32> -> vector<2x10xf32>
    %c0_125 = arith.constant 0 : index
    %c0_126 = arith.constant 0 : index
    %254 = vector.load %arg8[%c0_125, %c0_126] : memref<1x10xf32, #tpu.memory_space<vmem>>, vector<1x10xf32>
    %255 = vector.broadcast %254 : vector<1x10xf32> to vector<2x10xf32>
    %256 = arith.addf %253, %255 : vector<2x10xf32>
    %c0_127 = arith.constant 0 : index
    %c0_128 = arith.constant 0 : index
    %257 = vector.load %arg9[%c0_127, %c0_128] : memref<2x10xf32, #tpu.memory_space<vmem>>, vector<2x10xf32>
    tpu.vector_store %arg9[%c0_127, %c0_128], %256 {strides = array<i32>} : memref<2x10xf32, #tpu.memory_space<vmem>>, vector<2x10xf32>,
    return
  }
}

</mosaic_0001>

<llo_original>
// kernel: cnn_forward.1
$region0: #{cnn_forward.1}
  #allocation0 [shape = 'u32[]', space=smem, size = 0x4, offset = 0x4, fixed_abs, tag = 'smem constant byte address 0x4 - core index']
  #allocation1 [shape = 'u32[72,128]{1,0:T(1,128)}', space=vmem, size = 0x9000, scoped, tag = 'internal scratch']
  #allocation2 [shape = 'f32[2,6,6,32]{3,2,1,0:T(8,128)}', space=vmem, size = 0xc000, scoped, tag = 'scratch operand']
  #allocation3 [shape = 'f32[32,288]{1,0:T(8,128)}', space=vmem, size = 0xc000, scoped, tag = 'scratch operand']
  #allocation4 [shape = 'f32[2,256]{1,0:T(2,128)}', space=vmem, size = 0x800, scoped, tag = 'scratch operand']
  %s0 = inlined_call_operand.vmem [shape: f32[2,16,16,32], index: 0, kind: input, shape index: {}]
  %s1 = inlined_call_operand.vmem [shape: f32[9,1,32], index: 1, kind: input, shape index: {}]
  %s2 = inlined_call_operand.vmem [shape: f32[1,32], index: 2, kind: input, shape index: {}]
  %s3 = inlined_call_operand.vmem [shape: f32[288,64], index: 3, kind: input, shape index: {}]
  %s4 = inlined_call_operand.vmem [shape: f32[1,64], index: 4, kind: input, shape index: {}]
  %s5 = inlined_call_operand.vmem [shape: f32[256,128], index: 5, kind: input, shape index: {}]
  %s6 = inlined_call_operand.vmem [shape: f32[1,128], index: 6, kind: input, shape index: {}]
  %s7 = inlined_call_operand.vmem [shape: f32[128,10], index: 7, kind: input, shape index: {}]
  %s8 = inlined_call_operand.vmem [shape: f32[1,10], index: 8, kind: input, shape index: {}]
  %s9 = inlined_call_operand.hbm [shape: f32[2,10], index: 9, kind: output, shape index: {}]
  %s10 = sld [smem:[#allocation0]]
  $region46: #{cnn_forward.1} parent=0
    _
  %s12 = ssub.s32 1, %s10
  %s13 = scalar_select 0, %s12, %s10
  $region1: #{cnn_forward.1} parent=0
    #allocation5 [shape = 'u8[1024]{0}', space=vmem, size = 0x400, scoped, tag = 'output window, operand 0, single buffered']
    #allocation6 [shape = 's32[1]{0}', space=sflag, size = 0x4, scoped, tag = 'scoped memory for cnn_forward.1']
    %14 = vsyncpa [#allocation6], 0
    // Predicated region
    $region2: #{cnn_forward.1} parent=1 // pred_check
      _
    $region3: #{cnn_forward.1} parent=1 // pred_check_branch
      %16 = sbr.rel (0) target = $region5
    $region4: #{cnn_forward.1} parent=1 // pred_region
      _
    $region5: #{cnn_forward.1} parent=1 // pred_fallthru
      _
    // Predicated region
    $region6: #{cnn_forward.1} parent=1 // pred_check
      _
    $region7: #{cnn_forward.1} parent=1 // pred_check_branch
      %18 = sbr.rel (0) target = $region9
    $region8: #{cnn_forward.1} parent=1 // pred_region
      _
    $region9: #{cnn_forward.1} parent=1 // pred_fallthru
      _
    // Predicated region
    $region10: #{cnn_forward.1} parent=1 // pred_check
      _
    $region11: #{cnn_forward.1} parent=1 // pred_check_branch
      %20 = sbr.rel (0) target = $region13
    $region12: #{cnn_forward.1} parent=1 // pred_region
      _
    $region13: #{cnn_forward.1} parent=1 // pred_fallthru
      _
    // Predicated region
    $region14: #{cnn_forward.1} parent=1 // pred_check
      _
    $region15: #{cnn_forward.1} parent=1 // pred_check_branch
      %22 = sbr.rel (0) target = $region17
    $region16: #{cnn_forward.1} parent=1 // pred_region
      _
    $region17: #{cnn_forward.1} parent=1 // pred_fallthru
      _
    // Predicated region
    $region18: #{cnn_forward.1} parent=1 // pred_check
      _
    $region19: #{cnn_forward.1} parent=1 // pred_check_branch
      %24 = sbr.rel (0) target = $region21
    $region20: #{cnn_forward.1} parent=1 // pred_region
      _
    $region21: #{cnn_forward.1} parent=1 // pred_fallthru
      _
    // Predicated region
    $region22: #{cnn_forward.1} parent=1 // pred_check
      _
    $region23: #{cnn_forward.1} parent=1 // pred_check_branch
      %26 = sbr.rel (0) target = $region25
    $region24: #{cnn_forward.1} parent=1 // pred_region
      _
    $region25: #{cnn_forward.1} parent=1 // pred_fallthru
      _
    // Predicated region
    $region26: #{cnn_forward.1} parent=1 // pred_check
      _
    $region27: #{cnn_forward.1} parent=1 // pred_check_branch
      %28 = sbr.rel (0) target = $region29
    $region28: #{cnn_forward.1} parent=1 // pred_region
      _
    $region29: #{cnn_forward.1} parent=1 // pred_fallthru
      _
    // Predicated region
    $region30: #{cnn_forward.1} parent=1 // pred_check
      _
    $region31: #{cnn_forward.1} parent=1 // pred_check_branch
      %30 = sbr.rel (0) target = $region33
    $region32: #{cnn_forward.1} parent=1 // pred_region
      _
    $region33: #{cnn_forward.1} parent=1 // pred_fallthru
      _
    // Predicated region
    $region34: #{cnn_forward.1} parent=1 // pred_check
      _
    $region35: #{cnn_forward.1} parent=1 // pred_check_branch
      %32 = sbr.rel (0) target = $region37
    $region36: #{cnn_forward.1} parent=1 // pred_region
      _
    $region37: #{cnn_forward.1} parent=1 // pred_fallthru
      _
    %v33 = vld [vmem:[%s1] sm:$0x1]
    %v34 = vld [vmem:[%s1 + $0x1] sm:$0x1]
    %v35 = vld [vmem:[%s1 + $0x2] sm:$0x1]
    %v36 = vld [vmem:[%s1 + $0x3] sm:$0x1]
    %v37 = vld [vmem:[%s1 + $0x4] sm:$0x1]
    %v38 = vld [vmem:[%s1 + $0x5] sm:$0x1]
    %v39 = vld [vmem:[%s1 + $0x6] sm:$0x1]
    %v40 = vld [vmem:[%s1 + $0x7] sm:$0x1]
    %v41 = vld [vmem:[%s1 + $0x8] sm:$0x1]
    %v42 = vld [vmem:[%s0] sm:$0xff]
    %v43 = vld [vmem:[%s0 + $0x8] sm:$0x3f]
    %v44 = vld [vmem:[%s0 + $0x10] sm:$0xff]
    %v45 = vld [vmem:[%s0 + $0x18] sm:$0x3f]
    %v46 = vld [vmem:[%s0 + $0x20] sm:$0xff]
    %v47 = vld [vmem:[%s0 + $0x28] sm:$0x3f]
    %v48 = vld [vmem:[%s0 + $0x30] sm:$0xff]
    %v49 = vld [vmem:[%s0 + $0x38] sm:$0x3f]
    %v50 = vld [vmem:[%s0 + $0x40] sm:$0xff]
    %v51 = vld [vmem:[%s0 + $0x48] sm:$0x3f]
    %v52 = vld [vmem:[%s0 + $0x50] sm:$0xff]
    %v53 = vld [vmem:[%s0 + $0x58] sm:$0x3f]
    %v54 = vld [vmem:[%s0 + $0x60] sm:$0xff]
    %v55 = vld [vmem:[%s0 + $0x68] sm:$0x3f]
    %v56 = vld [vmem:[%s0 + $0x70] sm:$0xff]
    %v57 = vld [vmem:[%s0 + $0x78] sm:$0x3f]
    %v58 = vld [vmem:[%s0 + $0x80] sm:$0xff]
    %v59 = vld [vmem:[%s0 + $0x88] sm:$0x3f]
    %v60 = vld [vmem:[%s0 + $0x90] sm:$0xff]
    %v61 = vld [vmem:[%s0 + $0x98] sm:$0x3f]
    %v62 = vld [vmem:[%s0 + $0xa0] sm:$0xff]
    %v63 = vld [vmem:[%s0 + $0xa8] sm:$0x3f]
    %v64 = vld [vmem:[%s0 + $0xb0] sm:$0xff]
    %v65 = vld [vmem:[%s0 + $0xb8] sm:$0x3f]
    %v66 = vld [vmem:[%s0 + $0xc0] sm:$0xff]
    %v67 = vld [vmem:[%s0 + $0xc8] sm:$0x3f]
    %v68 = vld [vmem:[%s0 + $0xd0] sm:$0xff]
    %v69 = vld [vmem:[%s0 + $0xd8] sm:$0x3f]
    %v70 = vld [vmem:[%s0 + $0x100] sm:$0xff]
    %v71 = vld [vmem:[%s0 + $0x108] sm:$0x3f]
    %v72 = vld [vmem:[%s0 + $0x110] sm:$0xff]
    %v73 = vld [vmem:[%s0 + $0x118] sm:$0x3f]
    %v74 = vld [vmem:[%s0 + $0x120] sm:$0xff]
    %v75 = vld [vmem:[%s0 + $0x128] sm:$0x3f]
    %v76 = vld [vmem:[%s0 + $0x130] sm:$0xff]
    %v77 = vld [vmem:[%s0 + $0x138] sm:$0x3f]
    %v78 = vld [vmem:[%s0 + $0x140] sm:$0xff]
    %v79 = vld [vmem:[%s0 + $0x148] sm:$0x3f]
    %v80 = vld [vmem:[%s0 + $0x150] sm:$0xff]
    %v81 = vld [vmem:[%s0 + $0x158] sm:$0x3f]
    %v82 = vld [vmem:[%s0 + $0x160] sm:$0xff]
    %v83 = vld [vmem:[%s0 + $0x168] sm:$0x3f]
    %v84 = vld [vmem:[%s0 + $0x170] sm:$0xff]
    %v85 = vld [vmem:[%s0 + $0x178] sm:$0x3f]
    %v86 = vld [vmem:[%s0 + $0x180] sm:$0xff]
    %v87 = vld [vmem:[%s0 + $0x188] sm:$0x3f]
    %v88 = vld [vmem:[%s0 + $0x190] sm:$0xff]
    %v89 = vld [vmem:[%s0 + $0x198] sm:$0x3f]
    %v90 = vld [vmem:[%s0 + $0x1a0] sm:$0xff]
    %v91 = vld [vmem:[%s0 + $0x1a8] sm:$0x3f]
    %v92 = vld [vmem:[%s0 + $0x1b0] sm:$0xff]
    %v93 = vld [vmem:[%s0 + $0x1b8] sm:$0x3f]
    %v94 = vld [vmem:[%s0 + $0x1c0] sm:$0xff]
    %v95 = vld [vmem:[%s0 + $0x1c8] sm:$0x3f]
    %v96 = vld [vmem:[%s0 + $0x1d0] sm:$0xff]
    %v97 = vld [vmem:[%s0 + $0x1d8] sm:$0x3f]
    %v99 = vperm.slane %v33, 0
    %v101 = vmul.f32 %v42, %v99
    %v102 = vmul.f32 %v43, %v99
    %v103 = vmul.f32 %v44, %v99
    %v104 = vmul.f32 %v45, %v99
    %v105 = vmul.f32 %v46, %v99
    %v106 = vmul.f32 %v47, %v99
    %v107 = vmul.f32 %v48, %v99
    %v108 = vmul.f32 %v49, %v99
    %v109 = vmul.f32 %v50, %v99
    %v110 = vmul.f32 %v51, %v99
    %v111 = vmul.f32 %v52, %v99
    %v112 = vmul.f32 %v53, %v99
    %v113 = vmul.f32 %v54, %v99
    %v114 = vmul.f32 %v55, %v99
    %v115 = vmul.f32 %v56, %v99
    %v116 = vmul.f32 %v57, %v99
    %v117 = vmul.f32 %v58, %v99
    %v118 = vmul.f32 %v59, %v99
    %v119 = vmul.f32 %v60, %v99
    %v120 = vmul.f32 %v61, %v99
    %v121 = vmul.f32 %v62, %v99
    %v122 = vmul.f32 %v63, %v99
    %v123 = vmul.f32 %v64, %v99
    %v124 = vmul.f32 %v65, %v99
    %v125 = vmul.f32 %v70, %v99
    %v126 = vmul.f32 %v71, %v99
    %v127 = vmul.f32 %v72, %v99
    %v128 = vmul.f32 %v73, %v99
    %v129 = vmul.f32 %v74, %v99
    %v130 = vmul.f32 %v75, %v99
    %v131 = vmul.f32 %v76, %v99
    %v132 = vmul.f32 %v77, %v99
    %v133 = vmul.f32 %v78, %v99
    %v134 = vmul.f32 %v79, %v99
    %v135 = vmul.f32 %v80, %v99
    %v136 = vmul.f32 %v81, %v99
    %v137 = vmul.f32 %v82, %v99
    %v138 = vmul.f32 %v83, %v99
    %v139 = vmul.f32 %v84, %v99
    %v140 = vmul.f32 %v85, %v99
    %v141 = vmul.f32 %v86, %v99
    %v142 = vmul.f32 %v87, %v99
    %v143 = vmul.f32 %v88, %v99
    %v144 = vmul.f32 %v89, %v99
    %v145 = vmul.f32 %v90, %v99
    %v146 = vmul.f32 %v91, %v99
    %v147 = vmul.f32 %v92, %v99
    %v148 = vmul.f32 %v93, %v99
    %v150 = vperm.slane %v36, 0
    %v152 = vmul.f32 %v44, %v150
    %v153 = vmul.f32 %v45, %v150
    %v154 = vmul.f32 %v46, %v150
    %v155 = vmul.f32 %v47, %v150
    %v156 = vmul.f32 %v48, %v150
    %v157 = vmul.f32 %v49, %v150
    %v158 = vmul.f32 %v50, %v150
    %v159 = vmul.f32 %v51, %v150
    %v160 = vmul.f32 %v52, %v150
    %v161 = vmul.f32 %v53, %v150
    %v162 = vmul.f32 %v54, %v150
    %v163 = vmul.f32 %v55, %v150
    %v164 = vmul.f32 %v56, %v150
    %v165 = vmul.f32 %v57, %v150
    %v166 = vmul.f32 %v58, %v150
    %v167 = vmul.f32 %v59, %v150
    %v168 = vmul.f32 %v60, %v150
    %v169 = vmul.f32 %v61, %v150
    %v170 = vmul.f32 %v62, %v150
    %v171 = vmul.f32 %v63, %v150
    %v172 = vmul.f32 %v64, %v150
    %v173 = vmul.f32 %v65, %v150
    %v174 = vmul.f32 %v66, %v150
    %v175 = vmul.f32 %v67, %v150
    %v176 = vmul.f32 %v72, %v150
    %v177 = vmul.f32 %v73, %v150
    %v178 = vmul.f32 %v74, %v150
    %v179 = vmul.f32 %v75, %v150
    %v180 = vmul.f32 %v76, %v150
    %v181 = vmul.f32 %v77, %v150
    %v182 = vmul.f32 %v78, %v150
    %v183 = vmul.f32 %v79, %v150
    %v184 = vmul.f32 %v80, %v150
    %v185 = vmul.f32 %v81, %v150
    %v186 = vmul.f32 %v82, %v150
    %v187 = vmul.f32 %v83, %v150
    %v188 = vmul.f32 %v84, %v150
    %v189 = vmul.f32 %v85, %v150
    %v190 = vmul.f32 %v86, %v150
    %v191 = vmul.f32 %v87, %v150
    %v192 = vmul.f32 %v88, %v150
    %v193 = vmul.f32 %v89, %v150
    %v194 = vmul.f32 %v90, %v150
    %v195 = vmul.f32 %v91, %v150
    %v196 = vmul.f32 %v92, %v150
    %v197 = vmul.f32 %v93, %v150
    %v198 = vmul.f32 %v94, %v150
    %v199 = vmul.f32 %v95, %v150
    %v200 = vadd.f32 %v101, %v152
    %v201 = vadd.f32 %v102, %v153
    %v202 = vadd.f32 %v103, %v154
    %v203 = vadd.f32 %v104, %v155
    %v204 = vadd.f32 %v105, %v156
    %v205 = vadd.f32 %v106, %v157
    %v206 = vadd.f32 %v107, %v158
    %v207 = vadd.f32 %v108, %v159
    %v208 = vadd.f32 %v109, %v160
    %v209 = vadd.f32 %v110, %v161
    %v210 = vadd.f32 %v111, %v162
    %v211 = vadd.f32 %v112, %v163
    %v212 = vadd.f32 %v113, %v164
    %v213 = vadd.f32 %v114, %v165
    %v214 = vadd.f32 %v115, %v166
    %v215 = vadd.f32 %v116, %v167
    %v216 = vadd.f32 %v117, %v168
    %v217 = vadd.f32 %v118, %v169
    %v218 = vadd.f32 %v119, %v170
    %v219 = vadd.f32 %v120, %v171
    %v220 = vadd.f32 %v121, %v172
    %v221 = vadd.f32 %v122, %v173
    %v222 = vadd.f32 %v123, %v174
    %v223 = vadd.f32 %v124, %v175
    %v224 = vadd.f32 %v125, %v176
    %v225 = vadd.f32 %v126, %v177
    %v226 = vadd.f32 %v127, %v178
    %v227 = vadd.f32 %v128, %v179
    %v228 = vadd.f32 %v129, %v180
    %v229 = vadd.f32 %v130, %v181
    %v230 = vadd.f32 %v131, %v182
    %v231 = vadd.f32 %v132, %v183
    %v232 = vadd.f32 %v133, %v184
    %v233 = vadd.f32 %v134, %v185
    %v234 = vadd.f32 %v135, %v186
    %v235 = vadd.f32 %v136, %v187
    %v236 = vadd.f32 %v137, %v188
    %v237 = vadd.f32 %v138, %v189
    %v238 = vadd.f32 %v139, %v190
    %v239 = vadd.f32 %v140, %v191
    %v240 = vadd.f32 %v141, %v192
    %v241 = vadd.f32 %v142, %v193
    %v242 = vadd.f32 %v143, %v194
    %v243 = vadd.f32 %v144, %v195
    %v244 = vadd.f32 %v145, %v196
    %v245 = vadd.f32 %v146, %v197
    %v246 = vadd.f32 %v147, %v198
    %v247 = vadd.f32 %v148, %v199
    %v249 = vperm.slane %v39, 0
    %v251 = vmul.f32 %v46, %v249
    %v252 = vmul.f32 %v47, %v249
    %v253 = vmul.f32 %v48, %v249
    %v254 = vmul.f32 %v49, %v249
    %v255 = vmul.f32 %v50, %v249
    %v256 = vmul.f32 %v51, %v249
    %v257 = vmul.f32 %v52, %v249
    %v258 = vmul.f32 %v53, %v249
    %v259 = vmul.f32 %v54, %v249
    %v260 = vmul.f32 %v55, %v249
    %v261 = vmul.f32 %v56, %v249
    %v262 = vmul.f32 %v57, %v249
    %v263 = vmul.f32 %v58, %v249
    %v264 = vmul.f32 %v59, %v249
    %v265 = vmul.f32 %v60, %v249
    %v266 = vmul.f32 %v61, %v249
    %v267 = vmul.f32 %v62, %v249
    %v268 = vmul.f32 %v63, %v249
    %v269 = vmul.f32 %v64, %v249
    %v270 = vmul.f32 %v65, %v249
    %v271 = vmul.f32 %v66, %v249
    %v272 = vmul.f32 %v67, %v249
    %v273 = vmul.f32 %v68, %v249
    %v274 = vmul.f32 %v69, %v249
    %v275 = vmul.f32 %v74, %v249
    %v276 = vmul.f32 %v75, %v249
    %v277 = vmul.f32 %v76, %v249
    %v278 = vmul.f32 %v77, %v249
    %v279 = vmul.f32 %v78, %v249
    %v280 = vmul.f32 %v79, %v249
    %v281 = vmul.f32 %v80, %v249
    %v282 = vmul.f32 %v81, %v249
    %v283 = vmul.f32 %v82, %v249
    %v284 = vmul.f32 %v83, %v249
    %v285 = vmul.f32 %v84, %v249
    %v286 = vmul.f32 %v85, %v249
    %v287 = vmul.f32 %v86, %v249
    %v288 = vmul.f32 %v87, %v249
    %v289 = vmul.f32 %v88, %v249
    %v290 = vmul.f32 %v89, %v249
    %v291 = vmul.f32 %v90, %v249
    %v292 = vmul.f32 %v91, %v249
    %v293 = vmul.f32 %v92, %v249
    %v294 = vmul.f32 %v93, %v249
    %v295 = vmul.f32 %v94, %v249
    %v296 = vmul.f32 %v95, %v249
    %v297 = vmul.f32 %v96, %v249
    %v298 = vmul.f32 %v97, %v249
    %v299 = vadd.f32 %v200, %v251
    %v300 = vadd.f32 %v201, %v252
    %v301 = vadd.f32 %v202, %v253
    %v302 = vadd.f32 %v203, %v254
    %v303 = vadd.f32 %v204, %v255
    %v304 = vadd.f32 %v205, %v256
    %v305 = vadd.f32 %v206, %v257
    %v306 = vadd.f32 %v207, %v258
    %v307 = vadd.f32 %v208, %v259
    %v308 = vadd.f32 %v209, %v260
    %v309 = vadd.f32 %v210, %v261
    %v310 = vadd.f32 %v211, %v262
    %v311 = vadd.f32 %v212, %v263
    %v312 = vadd.f32 %v213, %v264
    %v313 = vadd.f32 %v214, %v265
    %v314 = vadd.f32 %v215, %v266
    %v315 = vadd.f32 %v216, %v267
    %v316 = vadd.f32 %v217, %v268
    %v317 = vadd.f32 %v218, %v269
    %v318 = vadd.f32 %v219, %v270
    %v319 = vadd.f32 %v220, %v271
    %v320 = vadd.f32 %v221, %v272
    %v321 = vadd.f32 %v222, %v273
    %v322 = vadd.f32 %v223, %v274
    %v323 = vadd.f32 %v224, %v275
    %v324 = vadd.f32 %v225, %v276
    %v325 = vadd.f32 %v226, %v277
    %v326 = vadd.f32 %v227, %v278
    %v327 = vadd.f32 %v228, %v279
    %v328 = vadd.f32 %v229, %v280
    %v329 = vadd.f32 %v230, %v281
    %v330 = vadd.f32 %v231, %v282
    %v331 = vadd.f32 %v232, %v283
    %v332 = vadd.f32 %v233, %v284
    %v333 = vadd.f32 %v234, %v285
    %v334 = vadd.f32 %v235, %v286
    %v335 = vadd.f32 %v236, %v287
    %v336 = vadd.f32 %v237, %v288
    %v337 = vadd.f32 %v238, %v289
    %v338 = vadd.f32 %v239, %v290
    %v339 = vadd.f32 %v240, %v291
    %v340 = vadd.f32 %v241, %v292
    %v341 = vadd.f32 %v242, %v293
    %v342 = vadd.f32 %v243, %v294
    %v343 = vadd.f32 %v244, %v295
    %v344 = vadd.f32 %v245, %v296
    %v345 = vadd.f32 %v246, %v297
    %v346 = vadd.f32 %v247, %v298
    %v347 = vld [vmem:[%s0 + $0x1] sm:$0xff]
    %v348 = vld [vmem:[%s0 + $0x9] sm:$0x3f]
    %v349 = vld [vmem:[%s0 + $0x11] sm:$0xff]
    %v350 = vld [vmem:[%s0 + $0x19] sm:$0x3f]
    %v351 = vld [vmem:[%s0 + $0x21] sm:$0xff]
    %v352 = vld [vmem:[%s0 + $0x29] sm:$0x3f]
    %v353 = vld [vmem:[%s0 + $0x31] sm:$0xff]
    %v354 = vld [vmem:[%s0 + $0x39] sm:$0x3f]
    %v355 = vld [vmem:[%s0 + $0x41] sm:$0xff]
    %v356 = vld [vmem:[%s0 + $0x49] sm:$0x3f]
    %v357 = vld [vmem:[%s0 + $0x51] sm:$0xff]
    %v358 = vld [vmem:[%s0 + $0x59] sm:$0x3f]
    %v359 = vld [vmem:[%s0 + $0x61] sm:$0xff]
    %v360 = vld [vmem:[%s0 + $0x69] sm:$0x3f]
    %v361 = vld [vmem:[%s0 + $0x71] sm:$0xff]
    %v362 = vld [vmem:[%s0 + $0x79] sm:$0x3f]
    %v363 = vld [vmem:[%s0 + $0x81] sm:$0xff]
    %v364 = vld [vmem:[%s0 + $0x89] sm:$0x3f]
    %v365 = vld [vmem:[%s0 + $0x91] sm:$0xff]
    %v366 = vld [vmem:[%s0 + $0x99] sm:$0x3f]
    %v367 = vld [vmem:[%s0 + $0xa1] sm:$0xff]
    %v368 = vld [vmem:[%s0 + $0xa9] sm:$0x3f]
    %v369 = vld [vmem:[%s0 + $0xb1] sm:$0xff]
    %v370 = vld [vmem:[%s0 + $0xb9] sm:$0x3f]
    %v371 = vld [vmem:[%s0 + $0xc1] sm:$0xff]
    %v372 = vld [vmem:[%s0 + $0xc9] sm:$0x3f]
    %v373 = vld [vmem:[%s0 + $0xd1] sm:$0xff]
    %v374 = vld [vmem:[%s0 + $0xd9] sm:$0x3f]
    %v375 = vld [vmem:[%s0 + $0x101] sm:$0xff]
    %v376 = vld [vmem:[%s0 + $0x109] sm:$0x3f]
    %v377 = vld [vmem:[%s0 + $0x111] sm:$0xff]
    %v378 = vld [vmem:[%s0 + $0x119] sm:$0x3f]
    %v379 = vld [vmem:[%s0 + $0x121] sm:$0xff]
    %v380 = vld [vmem:[%s0 + $0x129] sm:$0x3f]
    %v381 = vld [vmem:[%s0 + $0x131] sm:$0xff]
    %v382 = vld [vmem:[%s0 + $0x139] sm:$0x3f]
    %v383 = vld [vmem:[%s0 + $0x141] sm:$0xff]
    %v384 = vld [vmem:[%s0 + $0x149] sm:$0x3f]
    %v385 = vld [vmem:[%s0 + $0x151] sm:$0xff]
    %v386 = vld [vmem:[%s0 + $0x159] sm:$0x3f]
    %v387 = vld [vmem:[%s0 + $0x161] sm:$0xff]
    %v388 = vld [vmem:[%s0 + $0x169] sm:$0x3f]
    %v389 = vld [vmem:[%s0 + $0x171] sm:$0xff]
    %v390 = vld [vmem:[%s0 + $0x179] sm:$0x3f]
    %v391 = vld [vmem:[%s0 + $0x181] sm:$0xff]
    %v392 = vld [vmem:[%s0 + $0x189] sm:$0x3f]
    %v393 = vld [vmem:[%s0 + $0x191] sm:$0xff]
    %v394 = vld [vmem:[%s0 + $0x199] sm:$0x3f]
    %v395 = vld [vmem:[%s0 + $0x1a1] sm:$0xff]
    %v396 = vld [vmem:[%s0 + $0x1a9] sm:$0x3f]
    %v397 = vld [vmem:[%s0 + $0x1b1] sm:$0xff]
    %v398 = vld [vmem:[%s0 + $0x1b9] sm:$0x3f]
    %v399 = vld [vmem:[%s0 + $0x1c1] sm:$0xff]
    %v400 = vld [vmem:[%s0 + $0x1c9] sm:$0x3f]
    %v401 = vld [vmem:[%s0 + $0x1d1] sm:$0xff]
    %v402 = vld [vmem:[%s0 + $0x1d9] sm:$0x3f]
    %v404 = vperm.slane %v34, 0
    %v406 = vmul.f32 %v347, %v404
    %v407 = vmul.f32 %v348, %v404
    %v408 = vmul.f32 %v349, %v404
    %v409 = vmul.f32 %v350, %v404
    %v410 = vmul.f32 %v351, %v404
    %v411 = vmul.f32 %v352, %v404
    %v412 = vmul.f32 %v353, %v404
    %v413 = vmul.f32 %v354, %v404
    %v414 = vmul.f32 %v355, %v404
    %v415 = vmul.f32 %v356, %v404
    %v416 = vmul.f32 %v357, %v404
    %v417 = vmul.f32 %v358, %v404
    %v418 = vmul.f32 %v359, %v404
    %v419 = vmul.f32 %v360, %v404
    %v420 = vmul.f32 %v361, %v404
    %v421 = vmul.f32 %v362, %v404
    %v422 = vmul.f32 %v363, %v404
    %v423 = vmul.f32 %v364, %v404
    %v424 = vmul.f32 %v365, %v404
    %v425 = vmul.f32 %v366, %v404
    %v426 = vmul.f32 %v367, %v404
    %v427 = vmul.f32 %v368, %v404
    %v428 = vmul.f32 %v369, %v404
    %v429 = vmul.f32 %v370, %v404
    %v430 = vmul.f32 %v375, %v404
    %v431 = vmul.f32 %v376, %v404
    %v432 = vmul.f32 %v377, %v404
    %v433 = vmul.f32 %v378, %v404
    %v434 = vmul.f32 %v379, %v404
    %v435 = vmul.f32 %v380, %v404
    %v436 = vmul.f32 %v381, %v404
    %v437 = vmul.f32 %v382, %v404
    %v438 = vmul.f32 %v383, %v404
    %v439 = vmul.f32 %v384, %v404
    %v440 = vmul.f32 %v385, %v404
    %v441 = vmul.f32 %v386, %v404
    %v442 = vmul.f32 %v387, %v404
    %v443 = vmul.f32 %v388, %v404
    %v444 = vmul.f32 %v389, %v404
    %v445 = vmul.f32 %v390, %v404
    %v446 = vmul.f32 %v391, %v404
    %v447 = vmul.f32 %v392, %v404
    %v448 = vmul.f32 %v393, %v404
    %v449 = vmul.f32 %v394, %v404
    %v450 = vmul.f32 %v395, %v404
    %v451 = vmul.f32 %v396, %v404
    %v452 = vmul.f32 %v397, %v404
    %v453 = vmul.f32 %v398, %v404
    %v454 = vadd.f32 %v299, %v406
    %v455 = vadd.f32 %v300, %v407
    %v456 = vadd.f32 %v301, %v408
    %v457 = vadd.f32 %v302, %v409
    %v458 = vadd.f32 %v303, %v410
    %v459 = vadd.f32 %v304, %v411
    %v460 = vadd.f32 %v305, %v412
    %v461 = vadd.f32 %v306, %v413
    %v462 = vadd.f32 %v307, %v414
    %v463 = vadd.f32 %v308, %v415
    %v464 = vadd.f32 %v309, %v416
    %v465 = vadd.f32 %v310, %v417
    %v466 = vadd.f32 %v311, %v418
    %v467 = vadd.f32 %v312, %v419
    %v468 = vadd.f32 %v313, %v420
    %v469 = vadd.f32 %v314, %v421
    %v470 = vadd.f32 %v315, %v422
    %v471 = vadd.f32 %v316, %v423
    %v472 = vadd.f32 %v317, %v424
    %v473 = vadd.f32 %v318, %v425
    %v474 = vadd.f32 %v319, %v426
    %v475 = vadd.f32 %v320, %v427
    %v476 = vadd.f32 %v321, %v428
    %v477 = vadd.f32 %v322, %v429
    %v478 = vadd.f32 %v323, %v430
    %v479 = vadd.f32 %v324, %v431
    %v480 = vadd.f32 %v325, %v432
    %v481 = vadd.f32 %v326, %v433
    %v482 = vadd.f32 %v327, %v434
    %v483 = vadd.f32 %v328, %v435
    %v484 = vadd.f32 %v329, %v436
    %v485 = vadd.f32 %v330, %v437
    %v486 = vadd.f32 %v331, %v438
    %v487 = vadd.f32 %v332, %v439
    %v488 = vadd.f32 %v333, %v440
    %v489 = vadd.f32 %v334, %v441
    %v490 = vadd.f32 %v335, %v442
    %v491 = vadd.f32 %v336, %v443
    %v492 = vadd.f32 %v337, %v444
    %v493 = vadd.f32 %v338, %v445
    %v494 = vadd.f32 %v339, %v446
    %v495 = vadd.f32 %v340, %v447
    %v496 = vadd.f32 %v341, %v448
    %v497 = vadd.f32 %v342, %v449
    %v498 = vadd.f32 %v343, %v450
    %v499 = vadd.f32 %v344, %v451
    %v500 = vadd.f32 %v345, %v452
    %v501 = vadd.f32 %v346, %v453
    %v503 = vperm.slane %v37, 0
    %v505 = vmul.f32 %v349, %v503
    %v506 = vmul.f32 %v350, %v503
    %v507 = vmul.f32 %v351, %v503
    %v508 = vmul.f32 %v352, %v503
    %v509 = vmul.f32 %v353, %v503
    %v510 = vmul.f32 %v354, %v503
    %v511 = vmul.f32 %v355, %v503
    %v512 = vmul.f32 %v356, %v503
    %v513 = vmul.f32 %v357, %v503
    %v514 = vmul.f32 %v358, %v503
    %v515 = vmul.f32 %v359, %v503
    %v516 = vmul.f32 %v360, %v503
    %v517 = vmul.f32 %v361, %v503
    %v518 = vmul.f32 %v362, %v503
    %v519 = vmul.f32 %v363, %v503
    %v520 = vmul.f32 %v364, %v503
    %v521 = vmul.f32 %v365, %v503
    %v522 = vmul.f32 %v366, %v503
    %v523 = vmul.f32 %v367, %v503
    %v524 = vmul.f32 %v368, %v503
    %v525 = vmul.f32 %v369, %v503
    %v526 = vmul.f32 %v370, %v503
    %v527 = vmul.f32 %v371, %v503
    %v528 = vmul.f32 %v372, %v503
    %v529 = vmul.f32 %v377, %v503
    %v530 = vmul.f32 %v378, %v503
    %v531 = vmul.f32 %v379, %v503
    %v532 = vmul.f32 %v380, %v503
    %v533 = vmul.f32 %v381, %v503
    %v534 = vmul.f32 %v382, %v503
    %v535 = vmul.f32 %v383, %v503
    %v536 = vmul.f32 %v384, %v503
    %v537 = vmul.f32 %v385, %v503
    %v538 = vmul.f32 %v386, %v503
    %v539 = vmul.f32 %v387, %v503
    %v540 = vmul.f32 %v388, %v503
    %v541 = vmul.f32 %v389, %v503
    %v542 = vmul.f32 %v390, %v503
    %v543 = vmul.f32 %v391, %v503
    %v544 = vmul.f32 %v392, %v503
    %v545 = vmul.f32 %v393, %v503
    %v546 = vmul.f32 %v394, %v503
    %v547 = vmul.f32 %v395, %v503
    %v548 = vmul.f32 %v396, %v503
    %v549 = vmul.f32 %v397, %v503
    %v550 = vmul.f32 %v398, %v503
    %v551 = vmul.f32 %v399, %v503
    %v552 = vmul.f32 %v400, %v503
    %v553 = vadd.f32 %v454, %v505
    %v554 = vadd.f32 %v455, %v506
    %v555 = vadd.f32 %v456, %v507
    %v556 = vadd.f32 %v457, %v508
    %v557 = vadd.f32 %v458, %v509
    %v558 = vadd.f32 %v459, %v510
    %v559 = vadd.f32 %v460, %v511
    %v560 = vadd.f32 %v461, %v512
    %v561 = vadd.f32 %v462, %v513
    %v562 = vadd.f32 %v463, %v514
    %v563 = vadd.f32 %v464, %v515
    %v564 = vadd.f32 %v465, %v516
    %v565 = vadd.f32 %v466, %v517
    %v566 = vadd.f32 %v467, %v518
    %v567 = vadd.f32 %v468, %v519
    %v568 = vadd.f32 %v469, %v520
    %v569 = vadd.f32 %v470, %v521
    %v570 = vadd.f32 %v471, %v522
    %v571 = vadd.f32 %v472, %v523
    %v572 = vadd.f32 %v473, %v524
    %v573 = vadd.f32 %v474, %v525
    %v574 = vadd.f32 %v475, %v526
    %v575 = vadd.f32 %v476, %v527
    %v576 = vadd.f32 %v477, %v528
    %v577 = vadd.f32 %v478, %v529
    %v578 = vadd.f32 %v479, %v530
    %v579 = vadd.f32 %v480, %v531
    %v580 = vadd.f32 %v481, %v532
    %v581 = vadd.f32 %v482, %v533
    %v582 = vadd.f32 %v483, %v534
    %v583 = vadd.f32 %v484, %v535
    %v584 = vadd.f32 %v485, %v536
    %v585 = vadd.f32 %v486, %v537
    %v586 = vadd.f32 %v487, %v538
    %v587 = vadd.f32 %v488, %v539
    %v588 = vadd.f32 %v489, %v540
    %v589 = vadd.f32 %v490, %v541
    %v590 = vadd.f32 %v491, %v542
    %v591 = vadd.f32 %v492, %v543
    %v592 = vadd.f32 %v493, %v544
    %v593 = vadd.f32 %v494, %v545
    %v594 = vadd.f32 %v495, %v546
    %v595 = vadd.f32 %v496, %v547
    %v596 = vadd.f32 %v497, %v548
    %v597 = vadd.f32 %v498, %v549
    %v598 = vadd.f32 %v499, %v550
    %v599 = vadd.f32 %v500, %v551
    %v600 = vadd.f32 %v501, %v552
    %v602 = vperm.slane %v40, 0
    %v604 = vmul.f32 %v351, %v602
    %v605 = vmul.f32 %v352, %v602
    %v606 = vmul.f32 %v353, %v602
    %v607 = vmul.f32 %v354, %v602
    %v608 = vmul.f32 %v355, %v602
    %v609 = vmul.f32 %v356, %v602
    %v610 = vmul.f32 %v357, %v602
    %v611 = vmul.f32 %v358, %v602
    %v612 = vmul.f32 %v359, %v602
    %v613 = vmul.f32 %v360, %v602
    %v614 = vmul.f32 %v361, %v602
    %v615 = vmul.f32 %v362, %v602
    %v616 = vmul.f32 %v363, %v602
    %v617 = vmul.f32 %v364, %v602
    %v618 = vmul.f32 %v365, %v602
    %v619 = vmul.f32 %v366, %v602
    %v620 = vmul.f32 %v367, %v602
    %v621 = vmul.f32 %v368, %v602
    %v622 = vmul.f32 %v369, %v602
    %v623 = vmul.f32 %v370, %v602
    %v624 = vmul.f32 %v371, %v602
    %v625 = vmul.f32 %v372, %v602
    %v626 = vmul.f32 %v373, %v602
    %v627 = vmul.f32 %v374, %v602
    %v628 = vmul.f32 %v379, %v602
    %v629 = vmul.f32 %v380, %v602
    %v630 = vmul.f32 %v381, %v602
    %v631 = vmul.f32 %v382, %v602
    %v632 = vmul.f32 %v383, %v602
    %v633 = vmul.f32 %v384, %v602
    %v634 = vmul.f32 %v385, %v602
    %v635 = vmul.f32 %v386, %v602
    %v636 = vmul.f32 %v387, %v602
    %v637 = vmul.f32 %v388, %v602
    %v638 = vmul.f32 %v389, %v602
    %v639 = vmul.f32 %v390, %v602
    %v640 = vmul.f32 %v391, %v602
    %v641 = vmul.f32 %v392, %v602
    %v642 = vmul.f32 %v393, %v602
    %v643 = vmul.f32 %v394, %v602
    %v644 = vmul.f32 %v395, %v602
    %v645 = vmul.f32 %v396, %v602
    %v646 = vmul.f32 %v397, %v602
    %v647 = vmul.f32 %v398, %v602
    %v648 = vmul.f32 %v399, %v602
    %v649 = vmul.f32 %v400, %v602
    %v650 = vmul.f32 %v401, %v602
    %v651 = vmul.f32 %v402, %v602
    %v652 = vadd.f32 %v553, %v604
    %v653 = vadd.f32 %v554, %v605
    %v654 = vadd.f32 %v555, %v606
    %v655 = vadd.f32 %v556, %v607
    %v656 = vadd.f32 %v557, %v608
    %v657 = vadd.f32 %v558, %v609
    %v658 = vadd.f32 %v559, %v610
    %v659 = vadd.f32 %v560, %v611
    %v660 = vadd.f32 %v561, %v612
    %v661 = vadd.f32 %v562, %v613
    %v662 = vadd.f32 %v563, %v614
    %v663 = vadd.f32 %v564, %v615
    %v664 = vadd.f32 %v565, %v616
    %v665 = vadd.f32 %v566, %v617
    %v666 = vadd.f32 %v567, %v618
    %v667 = vadd.f32 %v568, %v619
    %v668 = vadd.f32 %v569, %v620
    %v669 = vadd.f32 %v570, %v621
    %v670 = vadd.f32 %v571, %v622
    %v671 = vadd.f32 %v572, %v623
    %v672 = vadd.f32 %v573, %v624
    %v673 = vadd.f32 %v574, %v625
    %v674 = vadd.f32 %v575, %v626
    %v675 = vadd.f32 %v576, %v627
    %v676 = vadd.f32 %v577, %v628
    %v677 = vadd.f32 %v578, %v629
    %v678 = vadd.f32 %v579, %v630
    %v679 = vadd.f32 %v580, %v631
    %v680 = vadd.f32 %v581, %v632
    %v681 = vadd.f32 %v582, %v633
    %v682 = vadd.f32 %v583, %v634
    %v683 = vadd.f32 %v584, %v635
    %v684 = vadd.f32 %v585, %v636
    %v685 = vadd.f32 %v586, %v637
    %v686 = vadd.f32 %v587, %v638
    %v687 = vadd.f32 %v588, %v639
    %v688 = vadd.f32 %v589, %v640
    %v689 = vadd.f32 %v590, %v641
    %v690 = vadd.f32 %v591, %v642
    %v691 = vadd.f32 %v592, %v643
    %v692 = vadd.f32 %v593, %v644
    %v693 = vadd.f32 %v594, %v645
    %v694 = vadd.f32 %v595, %v646
    %v695 = vadd.f32 %v596, %v647
    %v696 = vadd.f32 %v597, %v648
    %v697 = vadd.f32 %v598, %v649
    %v698 = vadd.f32 %v599, %v650
    %v699 = vadd.f32 %v600, %v651
    %v700 = vld [vmem:[%s0 + $0x2] sm:$0xff]
    %v701 = vld [vmem:[%s0 + $0xa] sm:$0x3f]
    %v702 = vld [vmem:[%s0 + $0x12] sm:$0xff]
    %v703 = vld [vmem:[%s0 + $0x1a] sm:$0x3f]
    %v704 = vld [vmem:[%s0 + $0x22] sm:$0xff]
    %v705 = vld [vmem:[%s0 + $0x2a] sm:$0x3f]
    %v706 = vld [vmem:[%s0 + $0x32] sm:$0xff]
    %v707 = vld [vmem:[%s0 + $0x3a] sm:$0x3f]
    %v708 = vld [vmem:[%s0 + $0x42] sm:$0xff]
    %v709 = vld [vmem:[%s0 + $0x4a] sm:$0x3f]
    %v710 = vld [vmem:[%s0 + $0x52] sm:$0xff]
    %v711 = vld [vmem:[%s0 + $0x5a] sm:$0x3f]
    %v712 = vld [vmem:[%s0 + $0x62] sm:$0xff]
    %v713 = vld [vmem:[%s0 + $0x6a] sm:$0x3f]
    %v714 = vld [vmem:[%s0 + $0x72] sm:$0xff]
    %v715 = vld [vmem:[%s0 + $0x7a] sm:$0x3f]
    %v716 = vld [vmem:[%s0 + $0x82] sm:$0xff]
    %v717 = vld [vmem:[%s0 + $0x8a] sm:$0x3f]
    %v718 = vld [vmem:[%s0 + $0x92] sm:$0xff]
    %v719 = vld [vmem:[%s0 + $0x9a] sm:$0x3f]
    %v720 = vld [vmem:[%s0 + $0xa2] sm:$0xff]
    %v721 = vld [vmem:[%s0 + $0xaa] sm:$0x3f]
    %v722 = vld [vmem:[%s0 + $0xb2] sm:$0xff]
    %v723 = vld [vmem:[%s0 + $0xba] sm:$0x3f]
    %v724 = vld [vmem:[%s0 + $0xc2] sm:$0xff]
    %v725 = vld [vmem:[%s0 + $0xca] sm:$0x3f]
    %v726 = vld [vmem:[%s0 + $0xd2] sm:$0xff]
    %v727 = vld [vmem:[%s0 + $0xda] sm:$0x3f]
    %v728 = vld [vmem:[%s0 + $0x102] sm:$0xff]
    %v729 = vld [vmem:[%s0 + $0x10a] sm:$0x3f]
    %v730 = vld [vmem:[%s0 + $0x112] sm:$0xff]
    %v731 = vld [vmem:[%s0 + $0x11a] sm:$0x3f]
    %v732 = vld [vmem:[%s0 + $0x122] sm:$0xff]
    %v733 = vld [vmem:[%s0 + $0x12a] sm:$0x3f]
    %v734 = vld [vmem:[%s0 + $0x132] sm:$0xff]
    %v735 = vld [vmem:[%s0 + $0x13a] sm:$0x3f]
    %v736 = vld [vmem:[%s0 + $0x142] sm:$0xff]
    %v737 = vld [vmem:[%s0 + $0x14a] sm:$0x3f]
    %v738 = vld [vmem:[%s0 + $0x152] sm:$0xff]
    %v739 = vld [vmem:[%s0 + $0x15a] sm:$0x3f]
    %v740 = vld [vmem:[%s0 + $0x162] sm:$0xff]
    %v741 = vld [vmem:[%s0 + $0x16a] sm:$0x3f]
    %v742 = vld [vmem:[%s0 + $0x172] sm:$0xff]
    %v743 = vld [vmem:[%s0 + $0x17a] sm:$0x3f]
    %v744 = vld [vmem:[%s0 + $0x182] sm:$0xff]
    %v745 = vld [vmem:[%s0 + $0x18a] sm:$0x3f]
    %v746 = vld [vmem:[%s0 + $0x192] sm:$0xff]
    %v747 = vld [vmem:[%s0 + $0x19a] sm:$0x3f]
    %v748 = vld [vmem:[%s0 + $0x1a2] sm:$0xff]
    %v749 = vld [vmem:[%s0 + $0x1aa] sm:$0x3f]
    %v750 = vld [vmem:[%s0 + $0x1b2] sm:$0xff]
    %v751 = vld [vmem:[%s0 + $0x1ba] sm:$0x3f]
    %v752 = vld [vmem:[%s0 + $0x1c2] sm:$0xff]
    %v753 = vld [vmem:[%s0 + $0x1ca] sm:$0x3f]
    %v754 = vld [vmem:[%s0 + $0x1d2] sm:$0xff]
    %v755 = vld [vmem:[%s0 + $0x1da] sm:$0x3f]
    %v757 = vperm.slane %v35, 0
    %v759 = vmul.f32 %v700, %v757
    %v760 = vmul.f32 %v701, %v757
    %v761 = vmul.f32 %v702, %v757
    %v762 = vmul.f32 %v703, %v757
    %v763 = vmul.f32 %v704, %v757
    %v764 = vmul.f32 %v705, %v757
    %v765 = vmul.f32 %v706, %v757
    %v766 = vmul.f32 %v707, %v757
    %v767 = vmul.f32 %v708, %v757
    %v768 = vmul.f32 %v709, %v757
    %v769 = vmul.f32 %v710, %v757
    %v770 = vmul.f32 %v711, %v757
    %v771 = vmul.f32 %v712, %v757
    %v772 = vmul.f32 %v713, %v757
    %v773 = vmul.f32 %v714, %v757
    %v774 = vmul.f32 %v715, %v757
    %v775 = vmul.f32 %v716, %v757
    %v776 = vmul.f32 %v717, %v757
    %v777 = vmul.f32 %v718, %v757
    %v778 = vmul.f32 %v719, %v757
    %v779 = vmul.f32 %v720, %v757
    %v780 = vmul.f32 %v721, %v757
    %v781 = vmul.f32 %v722, %v757
    %v782 = vmul.f32 %v723, %v757
    %v783 = vmul.f32 %v728, %v757
    %v784 = vmul.f32 %v729, %v757
    %v785 = vmul.f32 %v730, %v757
    %v786 = vmul.f32 %v731, %v757
    %v787 = vmul.f32 %v732, %v757
    %v788 = vmul.f32 %v733, %v757
    %v789 = vmul.f32 %v734, %v757
    %v790 = vmul.f32 %v735, %v757
    %v791 = vmul.f32 %v736, %v757
    %v792 = vmul.f32 %v737, %v757
    %v793 = vmul.f32 %v738, %v757
    %v794 = vmul.f32 %v739, %v757
    %v795 = vmul.f32 %v740, %v757
    %v796 = vmul.f32 %v741, %v757
    %v797 = vmul.f32 %v742, %v757
    %v798 = vmul.f32 %v743, %v757
    %v799 = vmul.f32 %v744, %v757
    %v800 = vmul.f32 %v745, %v757
    %v801 = vmul.f32 %v746, %v757
    %v802 = vmul.f32 %v747, %v757
    %v803 = vmul.f32 %v748, %v757
    %v804 = vmul.f32 %v749, %v757
    %v805 = vmul.f32 %v750, %v757
    %v806 = vmul.f32 %v751, %v757
    %v807 = vadd.f32 %v652, %v759
    %v808 = vadd.f32 %v653, %v760
    %v809 = vadd.f32 %v654, %v761
    %v810 = vadd.f32 %v655, %v762
    %v811 = vadd.f32 %v656, %v763
    %v812 = vadd.f32 %v657, %v764
    %v813 = vadd.f32 %v658, %v765
    %v814 = vadd.f32 %v659, %v766
    %v815 = vadd.f32 %v660, %v767
    %v816 = vadd.f32 %v661, %v768
    %v817 = vadd.f32 %v662, %v769
    %v818 = vadd.f32 %v663, %v770
    %v819 = vadd.f32 %v664, %v771
    %v820 = vadd.f32 %v665, %v772
    %v821 = vadd.f32 %v666, %v773
    %v822 = vadd.f32 %v667, %v774
    %v823 = vadd.f32 %v668, %v775
    %v824 = vadd.f32 %v669, %v776
    %v825 = vadd.f32 %v670, %v777
    %v826 = vadd.f32 %v671, %v778
    %v827 = vadd.f32 %v672, %v779
    %v828 = vadd.f32 %v673, %v780
    %v829 = vadd.f32 %v674, %v781
    %v830 = vadd.f32 %v675, %v782
    %v831 = vadd.f32 %v676, %v783
    %v832 = vadd.f32 %v677, %v784
    %v833 = vadd.f32 %v678, %v785
    %v834 = vadd.f32 %v679, %v786
    %v835 = vadd.f32 %v680, %v787
    %v836 = vadd.f32 %v681, %v788
    %v837 = vadd.f32 %v682, %v789
    %v838 = vadd.f32 %v683, %v790
    %v839 = vadd.f32 %v684, %v791
    %v840 = vadd.f32 %v685, %v792
    %v841 = vadd.f32 %v686, %v793
    %v842 = vadd.f32 %v687, %v794
    %v843 = vadd.f32 %v688, %v795
    %v844 = vadd.f32 %v689, %v796
    %v845 = vadd.f32 %v690, %v797
    %v846 = vadd.f32 %v691, %v798
    %v847 = vadd.f32 %v692, %v799
    %v848 = vadd.f32 %v693, %v800
    %v849 = vadd.f32 %v694, %v801
    %v850 = vadd.f32 %v695, %v802
    %v851 = vadd.f32 %v696, %v803
    %v852 = vadd.f32 %v697, %v804
    %v853 = vadd.f32 %v698, %v805
    %v854 = vadd.f32 %v699, %v806
    %v856 = vperm.slane %v38, 0
    %v858 = vmul.f32 %v702, %v856
    %v859 = vmul.f32 %v703, %v856
    %v860 = vmul.f32 %v704, %v856
    %v861 = vmul.f32 %v705, %v856
    %v862 = vmul.f32 %v706, %v856
    %v863 = vmul.f32 %v707, %v856
    %v864 = vmul.f32 %v708, %v856
    %v865 = vmul.f32 %v709, %v856
    %v866 = vmul.f32 %v710, %v856
    %v867 = vmul.f32 %v711, %v856
    %v868 = vmul.f32 %v712, %v856
    %v869 = vmul.f32 %v713, %v856
    %v870 = vmul.f32 %v714, %v856
    %v871 = vmul.f32 %v715, %v856
    %v872 = vmul.f32 %v716, %v856
    %v873 = vmul.f32 %v717, %v856
    %v874 = vmul.f32 %v718, %v856
    %v875 = vmul.f32 %v719, %v856
    %v876 = vmul.f32 %v720, %v856
    %v877 = vmul.f32 %v721, %v856
    %v878 = vmul.f32 %v722, %v856
    %v879 = vmul.f32 %v723, %v856
    %v880 = vmul.f32 %v724, %v856
    %v881 = vmul.f32 %v725, %v856
    %v882 = vmul.f32 %v730, %v856
    %v883 = vmul.f32 %v731, %v856
    %v884 = vmul.f32 %v732, %v856
    %v885 = vmul.f32 %v733, %v856
    %v886 = vmul.f32 %v734, %v856
    %v887 = vmul.f32 %v735, %v856
    %v888 = vmul.f32 %v736, %v856
    %v889 = vmul.f32 %v737, %v856
    %v890 = vmul.f32 %v738, %v856
    %v891 = vmul.f32 %v739, %v856
    %v892 = vmul.f32 %v740, %v856
    %v893 = vmul.f32 %v741, %v856
    %v894 = vmul.f32 %v742, %v856
    %v895 = vmul.f32 %v743, %v856
    %v896 = vmul.f32 %v744, %v856
    %v897 = vmul.f32 %v745, %v856
    %v898 = vmul.f32 %v746, %v856
    %v899 = vmul.f32 %v747, %v856
    %v900 = vmul.f32 %v748, %v856
    %v901 = vmul.f32 %v749, %v856
    %v902 = vmul.f32 %v750, %v856
    %v903 = vmul.f32 %v751, %v856
    %v904 = vmul.f32 %v752, %v856
    %v905 = vmul.f32 %v753, %v856
    %v906 = vadd.f32 %v807, %v858
    %v907 = vadd.f32 %v808, %v859
    %v908 = vadd.f32 %v809, %v860
    %v909 = vadd.f32 %v810, %v861
    %v910 = vadd.f32 %v811, %v862
    %v911 = vadd.f32 %v812, %v863
    %v912 = vadd.f32 %v813, %v864
    %v913 = vadd.f32 %v814, %v865
    %v914 = vadd.f32 %v815, %v866
    %v915 = vadd.f32 %v816, %v867
    %v916 = vadd.f32 %v817, %v868
    %v917 = vadd.f32 %v818, %v869
    %v918 = vadd.f32 %v819, %v870
    %v919 = vadd.f32 %v820, %v871
    %v920 = vadd.f32 %v821, %v872
    %v921 = vadd.f32 %v822, %v873
    %v922 = vadd.f32 %v823, %v874
    %v923 = vadd.f32 %v824, %v875
    %v924 = vadd.f32 %v825, %v876
    %v925 = vadd.f32 %v826, %v877
    %v926 = vadd.f32 %v827, %v878
    %v927 = vadd.f32 %v828, %v879
    %v928 = vadd.f32 %v829, %v880
    %v929 = vadd.f32 %v830, %v881
    %v930 = vadd.f32 %v831, %v882
    %v931 = vadd.f32 %v832, %v883
    %v932 = vadd.f32 %v833, %v884
    %v933 = vadd.f32 %v834, %v885
    %v934 = vadd.f32 %v835, %v886
    %v935 = vadd.f32 %v836, %v887
    %v936 = vadd.f32 %v837, %v888
    %v937 = vadd.f32 %v838, %v889
    %v938 = vadd.f32 %v839, %v890
    %v939 = vadd.f32 %v840, %v891
    %v940 = vadd.f32 %v841, %v892
    %v941 = vadd.f32 %v842, %v893
    %v942 = vadd.f32 %v843, %v894
    %v943 = vadd.f32 %v844, %v895
    %v944 = vadd.f32 %v845, %v896
    %v945 = vadd.f32 %v846, %v897
    %v946 = vadd.f32 %v847, %v898
    %v947 = vadd.f32 %v848, %v899
    %v948 = vadd.f32 %v849, %v900
    %v949 = vadd.f32 %v850, %v901
    %v950 = vadd.f32 %v851, %v902
    %v951 = vadd.f32 %v852, %v903
    %v952 = vadd.f32 %v853, %v904
    %v953 = vadd.f32 %v854, %v905
    %v955 = vperm.slane %v41, 0
    %v957 = vmul.f32 %v704, %v955
    %v958 = vmul.f32 %v705, %v955
    %v959 = vmul.f32 %v706, %v955
    %v960 = vmul.f32 %v707, %v955
    %v961 = vmul.f32 %v708, %v955
    %v962 = vmul.f32 %v709, %v955
    %v963 = vmul.f32 %v710, %v955
    %v964 = vmul.f32 %v711, %v955
    %v965 = vmul.f32 %v712, %v955
    %v966 = vmul.f32 %v713, %v955
    %v967 = vmul.f32 %v714, %v955
    %v968 = vmul.f32 %v715, %v955
    %v969 = vmul.f32 %v716, %v955
    %v970 = vmul.f32 %v717, %v955
    %v971 = vmul.f32 %v718, %v955
    %v972 = vmul.f32 %v719, %v955
    %v973 = vmul.f32 %v720, %v955
    %v974 = vmul.f32 %v721, %v955
    %v975 = vmul.f32 %v722, %v955
    %v976 = vmul.f32 %v723, %v955
    %v977 = vmul.f32 %v724, %v955
    %v978 = vmul.f32 %v725, %v955
    %v979 = vmul.f32 %v726, %v955
    %v980 = vmul.f32 %v727, %v955
    %v981 = vmul.f32 %v732, %v955
    %v982 = vmul.f32 %v733, %v955
    %v983 = vmul.f32 %v734, %v955
    %v984 = vmul.f32 %v735, %v955
    %v985 = vmul.f32 %v736, %v955
    %v986 = vmul.f32 %v737, %v955
    %v987 = vmul.f32 %v738, %v955
    %v988 = vmul.f32 %v739, %v955
    %v989 = vmul.f32 %v740, %v955
    %v990 = vmul.f32 %v741, %v955
    %v991 = vmul.f32 %v742, %v955
    %v992 = vmul.f32 %v743, %v955
    %v993 = vmul.f32 %v744, %v955
    %v994 = vmul.f32 %v745, %v955
    %v995 = vmul.f32 %v746, %v955
    %v996 = vmul.f32 %v747, %v955
    %v997 = vmul.f32 %v748, %v955
    %v998 = vmul.f32 %v749, %v955
    %v999 = vmul.f32 %v750, %v955
    %v1000 = vmul.f32 %v751, %v955
    %v1001 = vmul.f32 %v752, %v955
    %v1002 = vmul.f32 %v753, %v955
    %v1003 = vmul.f32 %v754, %v955
    %v1004 = vmul.f32 %v755, %v955
    %v1005 = vadd.f32 %v906, %v957
    %v1006 = vadd.f32 %v907, %v958
    %v1007 = vadd.f32 %v908, %v959
    %v1008 = vadd.f32 %v909, %v960
    %v1009 = vadd.f32 %v910, %v961
    %v1010 = vadd.f32 %v911, %v962
    %v1011 = vadd.f32 %v912, %v963
    %v1012 = vadd.f32 %v913, %v964
    %v1013 = vadd.f32 %v914, %v965
    %v1014 = vadd.f32 %v915, %v966
    %v1015 = vadd.f32 %v916, %v967
    %v1016 = vadd.f32 %v917, %v968
    %v1017 = vadd.f32 %v918, %v969
    %v1018 = vadd.f32 %v919, %v970
    %v1019 = vadd.f32 %v920, %v971
    %v1020 = vadd.f32 %v921, %v972
    %v1021 = vadd.f32 %v922, %v973
    %v1022 = vadd.f32 %v923, %v974
    %v1023 = vadd.f32 %v924, %v975
    %v1024 = vadd.f32 %v925, %v976
    %v1025 = vadd.f32 %v926, %v977
    %v1026 = vadd.f32 %v927, %v978
    %v1027 = vadd.f32 %v928, %v979
    %v1028 = vadd.f32 %v929, %v980
    %v1029 = vadd.f32 %v930, %v981
    %v1030 = vadd.f32 %v931, %v982
    %v1031 = vadd.f32 %v932, %v983
    %v1032 = vadd.f32 %v933, %v984
    %v1033 = vadd.f32 %v934, %v985
    %v1034 = vadd.f32 %v935, %v986
    %v1035 = vadd.f32 %v936, %v987
    %v1036 = vadd.f32 %v937, %v988
    %v1037 = vadd.f32 %v938, %v989
    %v1038 = vadd.f32 %v939, %v990
    %v1039 = vadd.f32 %v940, %v991
    %v1040 = vadd.f32 %v941, %v992
    %v1041 = vadd.f32 %v942, %v993
    %v1042 = vadd.f32 %v943, %v994
    %v1043 = vadd.f32 %v944, %v995
    %v1044 = vadd.f32 %v945, %v996
    %v1045 = vadd.f32 %v946, %v997
    %v1046 = vadd.f32 %v947, %v998
    %v1047 = vadd.f32 %v948, %v999
    %v1048 = vadd.f32 %v949, %v1000
    %v1049 = vadd.f32 %v950, %v1001
    %v1050 = vadd.f32 %v951, %v1002
    %v1051 = vadd.f32 %v952, %v1003
    %v1052 = vadd.f32 %v953, %v1004
    %v1053 = vld [vmem:[%s2] sm:$0x1]
    %v1055 = vperm.slane %v1053, 0
    %v1057 = vadd.f32 %v1005, %v1055
    %v1058 = vadd.f32 %v1006, %v1055
    %v1059 = vadd.f32 %v1007, %v1055
    %v1060 = vadd.f32 %v1008, %v1055
    %v1061 = vadd.f32 %v1009, %v1055
    %v1062 = vadd.f32 %v1010, %v1055
    %v1063 = vadd.f32 %v1011, %v1055
    %v1064 = vadd.f32 %v1012, %v1055
    %v1065 = vadd.f32 %v1013, %v1055
    %v1066 = vadd.f32 %v1014, %v1055
    %v1067 = vadd.f32 %v1015, %v1055
    %v1068 = vadd.f32 %v1016, %v1055
    %v1069 = vadd.f32 %v1017, %v1055
    %v1070 = vadd.f32 %v1018, %v1055
    %v1071 = vadd.f32 %v1019, %v1055
    %v1072 = vadd.f32 %v1020, %v1055
    %v1073 = vadd.f32 %v1021, %v1055
    %v1074 = vadd.f32 %v1022, %v1055
    %v1075 = vadd.f32 %v1023, %v1055
    %v1076 = vadd.f32 %v1024, %v1055
    %v1077 = vadd.f32 %v1025, %v1055
    %v1078 = vadd.f32 %v1026, %v1055
    %v1079 = vadd.f32 %v1027, %v1055
    %v1080 = vadd.f32 %v1028, %v1055
    %v1081 = vadd.f32 %v1029, %v1055
    %v1082 = vadd.f32 %v1030, %v1055
    %v1083 = vadd.f32 %v1031, %v1055
    %v1084 = vadd.f32 %v1032, %v1055
    %v1085 = vadd.f32 %v1033, %v1055
    %v1086 = vadd.f32 %v1034, %v1055
    %v1087 = vadd.f32 %v1035, %v1055
    %v1088 = vadd.f32 %v1036, %v1055
    %v1089 = vadd.f32 %v1037, %v1055
    %v1090 = vadd.f32 %v1038, %v1055
    %v1091 = vadd.f32 %v1039, %v1055
    %v1092 = vadd.f32 %v1040, %v1055
    %v1093 = vadd.f32 %v1041, %v1055
    %v1094 = vadd.f32 %v1042, %v1055
    %v1095 = vadd.f32 %v1043, %v1055
    %v1096 = vadd.f32 %v1044, %v1055
    %v1097 = vadd.f32 %v1045, %v1055
    %v1098 = vadd.f32 %v1046, %v1055
    %v1099 = vadd.f32 %v1047, %v1055
    %v1100 = vadd.f32 %v1048, %v1055
    %v1101 = vadd.f32 %v1049, %v1055
    %v1102 = vadd.f32 %v1050, %v1055
    %v1103 = vadd.f32 %v1051, %v1055
    %v1104 = vadd.f32 %v1052, %v1055
    %v1105 = vmax.f32 %v1057, 0.0
    %v1106 = vmax.f32 %v1058, 0.0
    %v1107 = vmax.f32 %v1059, 0.0
    %v1108 = vmax.f32 %v1060, 0.0
    %v1109 = vmax.f32 %v1061, 0.0
    %v1110 = vmax.f32 %v1062, 0.0
    %v1111 = vmax.f32 %v1063, 0.0
    %v1112 = vmax.f32 %v1064, 0.0
    %v1113 = vmax.f32 %v1065, 0.0
    %v1114 = vmax.f32 %v1066, 0.0
    %v1115 = vmax.f32 %v1067, 0.0
    %v1116 = vmax.f32 %v1068, 0.0
    %v1117 = vmax.f32 %v1069, 0.0
    %v1118 = vmax.f32 %v1070, 0.0
    %v1119 = vmax.f32 %v1071, 0.0
    %v1120 = vmax.f32 %v1072, 0.0
    %v1121 = vmax.f32 %v1073, 0.0
    %v1122 = vmax.f32 %v1074, 0.0
    %v1123 = vmax.f32 %v1075, 0.0
    %v1124 = vmax.f32 %v1076, 0.0
    %v1125 = vmax.f32 %v1077, 0.0
    %v1126 = vmax.f32 %v1078, 0.0
    %v1127 = vmax.f32 %v1079, 0.0
    %v1128 = vmax.f32 %v1080, 0.0
    %v1129 = vmax.f32 %v1081, 0.0
    %v1130 = vmax.f32 %v1082, 0.0
    %v1131 = vmax.f32 %v1083, 0.0
    %v1132 = vmax.f32 %v1084, 0.0
    %v1133 = vmax.f32 %v1085, 0.0
    %v1134 = vmax.f32 %v1086, 0.0
    %v1135 = vmax.f32 %v1087, 0.0
    %v1136 = vmax.f32 %v1088, 0.0
    %v1137 = vmax.f32 %v1089, 0.0
    %v1138 = vmax.f32 %v1090, 0.0
    %v1139 = vmax.f32 %v1091, 0.0
    %v1140 = vmax.f32 %v1092, 0.0
    %v1141 = vmax.f32 %v1093, 0.0
    %v1142 = vmax.f32 %v1094, 0.0
    %v1143 = vmax.f32 %v1095, 0.0
    %v1144 = vmax.f32 %v1096, 0.0
    %v1145 = vmax.f32 %v1097, 0.0
    %v1146 = vmax.f32 %v1098, 0.0
    %v1147 = vmax.f32 %v1099, 0.0
    %v1148 = vmax.f32 %v1100, 0.0
    %v1149 = vmax.f32 %v1101, 0.0
    %v1150 = vmax.f32 %v1102, 0.0
    %v1151 = vmax.f32 %v1103, 0.0
    %v1152 = vmax.f32 %v1104, 0.0
    %v1153 = vmax.f32 %v1105, %v1107
    %v1154 = vmax.f32 %v1106, %v1108
    %v1155 = vmax.f32 %v1109, %v1111
    %v1156 = vmax.f32 %v1110, %v1112
    %v1157 = vmax.f32 %v1113, %v1115
    %v1158 = vmax.f32 %v1114, %v1116
    %v1159 = vmax.f32 %v1117, %v1119
    %v1160 = vmax.f32 %v1118, %v1120
    %v1161 = vmax.f32 %v1121, %v1123
    %v1162 = vmax.f32 %v1122, %v1124
    %v1163 = vmax.f32 %v1125, %v1127
    %v1164 = vmax.f32 %v1126, %v1128
    %v1165 = vmax.f32 %v1129, %v1131
    %v1166 = vmax.f32 %v1130, %v1132
    %v1167 = vmax.f32 %v1133, %v1135
    %v1168 = vmax.f32 %v1134, %v1136
    %v1169 = vmax.f32 %v1137, %v1139
    %v1170 = vmax.f32 %v1138, %v1140
    %v1171 = vmax.f32 %v1141, %v1143
    %v1172 = vmax.f32 %v1142, %v1144
    %v1173 = vmax.f32 %v1145, %v1147
    %v1174 = vmax.f32 %v1146, %v1148
    %v1175 = vmax.f32 %v1149, %v1151
    %v1176 = vmax.f32 %v1150, %v1152
    %v1189 = vrot.slane %v1153, 1
    %v1190 = vrot.slane %v1155, 1
    %v1191 = vrot.slane %v1157, 1
    %v1192 = vrot.slane %v1159, 1
    %v1193 = vrot.slane %v1161, 1
    %v1194 = vrot.slane %v1163, 1
    %v1195 = vrot.slane %v1165, 1
    %v1196 = vrot.slane %v1167, 1
    %v1197 = vrot.slane %v1169, 1
    %v1198 = vrot.slane %v1171, 1
    %v1199 = vrot.slane %v1173, 1
    %v1200 = vrot.slane %v1175, 1
    %v1213 = vmax.f32 %v1153, %v1189
    %v1214 = vmax.f32 %v1155, %v1190
    %v1215 = vmax.f32 %v1157, %v1191
    %v1216 = vmax.f32 %v1159, %v1192
    %v1217 = vmax.f32 %v1161, %v1193
    %v1218 = vmax.f32 %v1163, %v1194
    %v1219 = vmax.f32 %v1165, %v1195
    %v1220 = vmax.f32 %v1167, %v1196
    %v1221 = vmax.f32 %v1169, %v1197
    %v1222 = vmax.f32 %v1171, %v1198
    %v1223 = vmax.f32 %v1173, %v1199
    %v1224 = vmax.f32 %v1175, %v1200
    %vm1225 = vcmask 253952
    %1226 = vst.msk [vmem:[#allocation2] sm:$0x1] %vm1225, %v1213
    %1227 = vst.msk [vmem:[#allocation2 + $0x8] sm:$0x1] %vm1225, %v1214
    %1228 = vst.msk [vmem:[#allocation2 + $0x10] sm:$0x1] %vm1225, %v1215
    %1229 = vst.msk [vmem:[#allocation2 + $0x18] sm:$0x1] %vm1225, %v1216
    %1230 = vst.msk [vmem:[#allocation2 + $0x20] sm:$0x1] %vm1225, %v1217
    %1231 = vst.msk [vmem:[#allocation2 + $0x28] sm:$0x1] %vm1225, %v1218
    %1232 = vst.msk [vmem:[#allocation2 + $0x30] sm:$0x1] %vm1225, %v1219
    %1233 = vst.msk [vmem:[#allocation2 + $0x38] sm:$0x1] %vm1225, %v1220
    %1234 = vst.msk [vmem:[#allocation2 + $0x40] sm:$0x1] %vm1225, %v1221
    %1235 = vst.msk [vmem:[#allocation2 + $0x48] sm:$0x1] %vm1225, %v1222
    %1236 = vst.msk [vmem:[#allocation2 + $0x50] sm:$0x1] %vm1225, %v1223
    %1237 = vst.msk [vmem:[#allocation2 + $0x58] sm:$0x1] %vm1225, %v1224
    %vm1238 = vcmask 256002
    %1239 = vst.msk [vmem:[#allocation2 - $0x1] sm:$0x4] %vm1238, %v1213
    %1240 = vst.msk [vmem:[#allocation2 + $0x7] sm:$0x4] %vm1238, %v1214
    %1241 = vst.msk [vmem:[#allocation2 + $0xf] sm:$0x4] %vm1238, %v1215
    %1242 = vst.msk [vmem:[#allocation2 + $0x17] sm:$0x4] %vm1238, %v1216
    %1243 = vst.msk [vmem:[#allocation2 + $0x1f] sm:$0x4] %vm1238, %v1217
    %1244 = vst.msk [vmem:[#allocation2 + $0x27] sm:$0x4] %vm1238, %v1218
    %1245 = vst.msk [vmem:[#allocation2 + $0x2f] sm:$0x4] %vm1238, %v1219
    %1246 = vst.msk [vmem:[#allocation2 + $0x37] sm:$0x4] %vm1238, %v1220
    %1247 = vst.msk [vmem:[#allocation2 + $0x3f] sm:$0x4] %vm1238, %v1221
    %1248 = vst.msk [vmem:[#allocation2 + $0x47] sm:$0x4] %vm1238, %v1222
    %1249 = vst.msk [vmem:[#allocation2 + $0x4f] sm:$0x4] %vm1238, %v1223
    %1250 = vst.msk [vmem:[#allocation2 + $0x57] sm:$0x4] %vm1238, %v1224
    %vm1251 = vcmask 258052
    %1252 = vst.msk [vmem:[#allocation2 - $0x2] sm:$0x10] %vm1251, %v1213
    %1253 = vst.msk [vmem:[#allocation2 + $0x6] sm:$0x10] %vm1251, %v1214
    %1254 = vst.msk [vmem:[#allocation2 + $0xe] sm:$0x10] %vm1251, %v1215
    %1255 = vst.msk [vmem:[#allocation2 + $0x16] sm:$0x10] %vm1251, %v1216
    %1256 = vst.msk [vmem:[#allocation2 + $0x1e] sm:$0x10] %vm1251, %v1217
    %1257 = vst.msk [vmem:[#allocation2 + $0x26] sm:$0x10] %vm1251, %v1218
    %1258 = vst.msk [vmem:[#allocation2 + $0x2e] sm:$0x10] %vm1251, %v1219
    %1259 = vst.msk [vmem:[#allocation2 + $0x36] sm:$0x10] %vm1251, %v1220
    %1260 = vst.msk [vmem:[#allocation2 + $0x3e] sm:$0x10] %vm1251, %v1221
    %1261 = vst.msk [vmem:[#allocation2 + $0x46] sm:$0x10] %vm1251, %v1222
    %1262 = vst.msk [vmem:[#allocation2 + $0x4e] sm:$0x10] %vm1251, %v1223
    %1263 = vst.msk [vmem:[#allocation2 + $0x56] sm:$0x10] %vm1251, %v1224
    %vm1264 = vcmask 260102
    %1265 = vst.msk [vmem:[#allocation2 - $0x3] sm:$0x40] %vm1264, %v1213
    %1266 = vst.msk [vmem:[#allocation2 + $0x5] sm:$0x40] %vm1264, %v1214
    %1267 = vst.msk [vmem:[#allocation2 + $0xd] sm:$0x40] %vm1264, %v1215
    %1268 = vst.msk [vmem:[#allocation2 + $0x15] sm:$0x40] %vm1264, %v1216
    %1269 = vst.msk [vmem:[#allocation2 + $0x1d] sm:$0x40] %vm1264, %v1217
    %1270 = vst.msk [vmem:[#allocation2 + $0x25] sm:$0x40] %vm1264, %v1218
    %1271 = vst.msk [vmem:[#allocation2 + $0x2d] sm:$0x40] %vm1264, %v1219
    %1272 = vst.msk [vmem:[#allocation2 + $0x35] sm:$0x40] %vm1264, %v1220
    %1273 = vst.msk [vmem:[#allocation2 + $0x3d] sm:$0x40] %vm1264, %v1221
    %1274 = vst.msk [vmem:[#allocation2 + $0x45] sm:$0x40] %vm1264, %v1222
    %1275 = vst.msk [vmem:[#allocation2 + $0x4d] sm:$0x40] %vm1264, %v1223
    %1276 = vst.msk [vmem:[#allocation2 + $0x55] sm:$0x40] %vm1264, %v1224
    %v1289 = vrot.slane %v1154, 1
    %v1290 = vrot.slane %v1156, 1
    %v1291 = vrot.slane %v1158, 1
    %v1292 = vrot.slane %v1160, 1
    %v1293 = vrot.slane %v1162, 1
    %v1294 = vrot.slane %v1164, 1
    %v1295 = vrot.slane %v1166, 1
    %v1296 = vrot.slane %v1168, 1
    %v1297 = vrot.slane %v1170, 1
    %v1298 = vrot.slane %v1172, 1
    %v1299 = vrot.slane %v1174, 1
    %v1300 = vrot.slane %v1176, 1
    %v1313 = vmax.f32 %v1154, %v1289
    %v1314 = vmax.f32 %v1156, %v1290
    %v1315 = vmax.f32 %v1158, %v1291
    %v1316 = vmax.f32 %v1160, %v1292
    %v1317 = vmax.f32 %v1162, %v1293
    %v1318 = vmax.f32 %v1164, %v1294
    %v1319 = vmax.f32 %v1166, %v1295
    %v1320 = vmax.f32 %v1168, %v1296
    %v1321 = vmax.f32 %v1170, %v1297
    %v1322 = vmax.f32 %v1172, %v1298
    %v1323 = vmax.f32 %v1174, %v1299
    %v1324 = vmax.f32 %v1176, %v1300
    %1325 = vst.msk [vmem:[#allocation2 + $0x4] sm:$0x1] %vm1225, %v1313
    %1326 = vst.msk [vmem:[#allocation2 + $0xc] sm:$0x1] %vm1225, %v1314
    %1327 = vst.msk [vmem:[#allocation2 + $0x14] sm:$0x1] %vm1225, %v1315
    %1328 = vst.msk [vmem:[#allocation2 + $0x1c] sm:$0x1] %vm1225, %v1316
    %1329 = vst.msk [vmem:[#allocation2 + $0x24] sm:$0x1] %vm1225, %v1317
    %1330 = vst.msk [vmem:[#allocation2 + $0x2c] sm:$0x1] %vm1225, %v1318
    %1331 = vst.msk [vmem:[#allocation2 + $0x34] sm:$0x1] %vm1225, %v1319
    %1332 = vst.msk [vmem:[#allocation2 + $0x3c] sm:$0x1] %vm1225, %v1320
    %1333 = vst.msk [vmem:[#allocation2 + $0x44] sm:$0x1] %vm1225, %v1321
    %1334 = vst.msk [vmem:[#allocation2 + $0x4c] sm:$0x1] %vm1225, %v1322
    %1335 = vst.msk [vmem:[#allocation2 + $0x54] sm:$0x1] %vm1225, %v1323
    %1336 = vst.msk [vmem:[#allocation2 + $0x5c] sm:$0x1] %vm1225, %v1324
    %1337 = vst.msk [vmem:[#allocation2 + $0x3] sm:$0x4] %vm1238, %v1313
    %1338 = vst.msk [vmem:[#allocation2 + $0xb] sm:$0x4] %vm1238, %v1314
    %1339 = vst.msk [vmem:[#allocation2 + $0x13] sm:$0x4] %vm1238, %v1315
    %1340 = vst.msk [vmem:[#allocation2 + $0x1b] sm:$0x4] %vm1238, %v1316
    %1341 = vst.msk [vmem:[#allocation2 + $0x23] sm:$0x4] %vm1238, %v1317
    %1342 = vst.msk [vmem:[#allocation2 + $0x2b] sm:$0x4] %vm1238, %v1318
    %1343 = vst.msk [vmem:[#allocation2 + $0x33] sm:$0x4] %vm1238, %v1319
    %1344 = vst.msk [vmem:[#allocation2 + $0x3b] sm:$0x4] %vm1238, %v1320
    %1345 = vst.msk [vmem:[#allocation2 + $0x43] sm:$0x4] %vm1238, %v1321
    %1346 = vst.msk [vmem:[#allocation2 + $0x4b] sm:$0x4] %vm1238, %v1322
    %1347 = vst.msk [vmem:[#allocation2 + $0x53] sm:$0x4] %vm1238, %v1323
    %1348 = vst.msk [vmem:[#allocation2 + $0x5b] sm:$0x4] %vm1238, %v1324
    %v1349 = vld [vmem:[#allocation2] sm:$0x3f]
    %s1350 = scalar_lea.vmem [#allocation2], 8
    %v1351 = vld [vmem:[%s1350] sm:$0x3f]
    %s1352 = scalar_lea.vmem [#allocation2], 16
    %v1353 = vld [vmem:[%s1352] sm:$0x3f]
    %s1354 = scalar_lea.vmem [#allocation2], 24
    %v1355 = vld [vmem:[%s1354] sm:$0x3f]
    %s1356 = scalar_lea.vmem [#allocation2], 32
    %v1357 = vld [vmem:[%s1356] sm:$0x3f]
    %s1358 = scalar_lea.vmem [#allocation2], 40
    %v1359 = vld [vmem:[%s1358] sm:$0x3f]
    %v1361 = vrot.slane %v1349, 1
    %1362 = vrot.lane.b32.xlu0 %v1361, 32
    %v1363 = vpop.permute.xlu0 %1362
    %v1365 = vrot.slane %v1349, 2
    %1366 = vrot.lane.b32.xlu0 %v1365, 64
    %v1367 = vpop.permute.xlu0 %1366
    %1370 = vrot.lane.b32.xlu0 %v1351, 96
    %v1371 = vpop.permute.xlu0 %1370
    %v1373 = vrot.slane %v1351, 1
    %v1375 = vrot.slane %v1351, 2
    %1376 = vrot.lane.b32.xlu0 %v1375, 32
    %v1377 = vpop.permute.xlu0 %1376
    %1380 = vrot.lane.b32.xlu0 %v1353, 64
    %v1381 = vpop.permute.xlu0 %1380
    %v1383 = vrot.slane %v1353, 1
    %1384 = vrot.lane.b32.xlu0 %v1383, 96
    %v1385 = vpop.permute.xlu0 %1384
    %v1387 = vrot.slane %v1353, 2
    %vm1389 = vcmask 261120
    %v1390 = vsel %vm1389, %v1349, %v1363
    %vm1391 = vcmask 523264
    %v1392 = vsel %vm1391, %v1390, %v1367
    %vm1393 = vcmask 785408
    %v1394 = vsel %vm1393, %v1392, %v1371
    %v1395 = vsel %vm1389, %v1373, %v1377
    %v1396 = vsel %vm1391, %v1395, %v1381
    %v1397 = vsel %vm1393, %v1396, %v1385
    %1398 = vst [vmem:[#allocation3] sm:$0xf] %v1394
    %1399 = vst [vmem:[#allocation3 + $0x8] sm:$0xf] %v1397
    %vm1400 = vcmask 257024
    %1401 = vst.msk [vmem:[#allocation3 + $0x10] sm:$0xf] %vm1400, %v1387
    %1402 = vrot.lane.b32.xlu0 %v1373, 32
    %v1403 = vpop.permute.xlu0 %1402
    %1405 = vrot.lane.b32.xlu0 %v1375, 64
    %v1406 = vpop.permute.xlu0 %1405
    %1408 = vrot.lane.b32.xlu0 %v1353, 96
    %v1409 = vpop.permute.xlu0 %1408
    %1412 = vrot.lane.b32.xlu0 %v1387, 32
    %v1413 = vpop.permute.xlu0 %1412
    %1416 = vrot.lane.b32.xlu0 %v1355, 64
    %v1417 = vpop.permute.xlu0 %1416
    %v1419 = vrot.slane %v1355, 1
    %1420 = vrot.lane.b32.xlu0 %v1419, 96
    %v1421 = vpop.permute.xlu0 %1420
    %v1423 = vrot.slane %v1355, 2
    %v1424 = vsel %vm1389, %v1351, %v1403
    %v1425 = vsel %vm1391, %v1424, %v1406
    %v1426 = vsel %vm1393, %v1425, %v1409
    %v1427 = vsel %vm1389, %v1383, %v1413
    %v1428 = vsel %vm1391, %v1427, %v1417
    %v1429 = vsel %vm1393, %v1428, %v1421
    %v1432 = vrot.slane %v1426, 4
    %v1433 = vrot.slane %v1429, 4
    %v1434 = vrot.slane %v1423, 4
    %1438 = vst [vmem:[#allocation3] sm:$0xf0] %v1432
    %1439 = vst [vmem:[#allocation3 + $0x8] sm:$0xf0] %v1433
    %vm1440 = vcmask 261124
    %1441 = vst.msk [vmem:[#allocation3 + $0x10] sm:$0xf0] %vm1440, %v1434
    %1442 = vrot.lane.b32.xlu0 %v1383, 32
    %v1443 = vpop.permute.xlu0 %1442
    %1445 = vrot.lane.b32.xlu0 %v1387, 64
    %v1446 = vpop.permute.xlu0 %1445
    %1448 = vrot.lane.b32.xlu0 %v1355, 96
    %v1449 = vpop.permute.xlu0 %1448
    %1452 = vrot.lane.b32.xlu0 %v1423, 32
    %v1453 = vpop.permute.xlu0 %1452
    %1456 = vrot.lane.b32.xlu0 %v1357, 64
    %v1457 = vpop.permute.xlu0 %1456
    %v1459 = vrot.slane %v1357, 1
    %1460 = vrot.lane.b32.xlu0 %v1459, 96
    %v1461 = vpop.permute.xlu0 %1460
    %v1463 = vrot.slane %v1357, 2
    %v1465 = vsel %vm1389, %v1353, %v1443
    %v1466 = vsel %vm1391, %v1465, %v1446
    %v1467 = vsel %vm1393, %v1466, %v1449
    %v1468 = vsel %vm1389, %v1419, %v1453
    %v1469 = vsel %vm1391, %v1468, %v1457
    %v1470 = vsel %vm1393, %v1469, %v1461
    %1471 = vst [vmem:[#allocation3 + $0x18] sm:$0xf] %v1467
    %1472 = vst [vmem:[#allocation3 + $0x20] sm:$0xf] %v1470
    %1473 = vst.msk [vmem:[#allocation3 + $0x28] sm:$0xf] %vm1400, %v1463
    %1474 = vrot.lane.b32.xlu0 %v1419, 32
    %v1475 = vpop.permute.xlu0 %1474
    %1477 = vrot.lane.b32.xlu0 %v1423, 64
    %v1478 = vpop.permute.xlu0 %1477
    %1480 = vrot.lane.b32.xlu0 %v1357, 96
    %v1481 = vpop.permute.xlu0 %1480
    %1484 = vrot.lane.b32.xlu0 %v1463, 32
    %v1485 = vpop.permute.xlu0 %1484
    %1488 = vrot.lane.b32.xlu0 %v1359, 64
    %v1489 = vpop.permute.xlu0 %1488
    %v1491 = vrot.slane %v1359, 1
    %1492 = vrot.lane.b32.xlu0 %v1491, 96
    %v1493 = vpop.permute.xlu0 %1492
    %v1495 = vrot.slane %v1359, 2
    %v1496 = vsel %vm1389, %v1355, %v1475
    %v1497 = vsel %vm1391, %v1496, %v1478
    %v1498 = vsel %vm1393, %v1497, %v1481
    %v1499 = vsel %vm1389, %v1459, %v1485
    %v1500 = vsel %vm1391, %v1499, %v1489
    %v1501 = vsel %vm1393, %v1500, %v1493
    %v1504 = vrot.slane %v1498, 4
    %v1505 = vrot.slane %v1501, 4
    %v1506 = vrot.slane %v1495, 4
    %1510 = vst [vmem:[#allocation3 + $0x18] sm:$0xf0] %v1504
    %1511 = vst [vmem:[#allocation3 + $0x20] sm:$0xf0] %v1505
    %1512 = vst.msk [vmem:[#allocation3 + $0x28] sm:$0xf0] %vm1440, %v1506
    %s1513 = scalar_lea.vmem [#allocation2], 48
    %v1514 = vld [vmem:[%s1513] sm:$0x3f]
    %s1515 = scalar_lea.vmem [#allocation2], 56
    %v1516 = vld [vmem:[%s1515] sm:$0x3f]
    %s1517 = scalar_lea.vmem [#allocation2], 64
    %v1518 = vld [vmem:[%s1517] sm:$0x3f]
    %s1519 = scalar_lea.vmem [#allocation2], 72
    %v1520 = vld [vmem:[%s1519] sm:$0x3f]
    %s1521 = scalar_lea.vmem [#allocation2], 80
    %v1522 = vld [vmem:[%s1521] sm:$0x3f]
    %s1523 = scalar_lea.vmem [#allocation2], 88
    %v1524 = vld [vmem:[%s1523] sm:$0x3f]
    %v1526 = vrot.slane %v1514, 1
    %1527 = vrot.lane.b32.xlu0 %v1526, 32
    %v1528 = vpop.permute.xlu0 %1527
    %v1530 = vrot.slane %v1514, 2
    %1531 = vrot.lane.b32.xlu0 %v1530, 64
    %v1532 = vpop.permute.xlu0 %1531
    %1535 = vrot.lane.b32.xlu0 %v1516, 96
    %v1536 = vpop.permute.xlu0 %1535
    %v1538 = vrot.slane %v1516, 1
    %v1540 = vrot.slane %v1516, 2
    %1541 = vrot.lane.b32.xlu0 %v1540, 32
    %v1542 = vpop.permute.xlu0 %1541
    %1545 = vrot.lane.b32.xlu0 %v1518, 64
    %v1546 = vpop.permute.xlu0 %1545
    %v1548 = vrot.slane %v1518, 1
    %1549 = vrot.lane.b32.xlu0 %v1548, 96
    %v1550 = vpop.permute.xlu0 %1549
    %v1552 = vrot.slane %v1518, 2
    %v1554 = vsel %vm1389, %v1514, %v1528
    %v1555 = vsel %vm1391, %v1554, %v1532
    %v1556 = vsel %vm1393, %v1555, %v1536
    %v1557 = vsel %vm1389, %v1538, %v1542
    %v1558 = vsel %vm1391, %v1557, %v1546
    %v1559 = vsel %vm1393, %v1558, %v1550
    %1560 = vst [vmem:[#allocation3 + $0x30] sm:$0xf] %v1556
    %1561 = vst [vmem:[#allocation3 + $0x38] sm:$0xf] %v1559
    %1562 = vst.msk [vmem:[#allocation3 + $0x40] sm:$0xf] %vm1400, %v1552
    %1563 = vrot.lane.b32.xlu0 %v1538, 32
    %v1564 = vpop.permute.xlu0 %1563
    %1566 = vrot.lane.b32.xlu0 %v1540, 64
    %v1567 = vpop.permute.xlu0 %1566
    %1569 = vrot.lane.b32.xlu0 %v1518, 96
    %v1570 = vpop.permute.xlu0 %1569
    %1573 = vrot.lane.b32.xlu0 %v1552, 32
    %v1574 = vpop.permute.xlu0 %1573
    %1577 = vrot.lane.b32.xlu0 %v1520, 64
    %v1578 = vpop.permute.xlu0 %1577
    %v1580 = vrot.slane %v1520, 1
    %1581 = vrot.lane.b32.xlu0 %v1580, 96
    %v1582 = vpop.permute.xlu0 %1581
    %v1584 = vrot.slane %v1520, 2
    %v1585 = vsel %vm1389, %v1516, %v1564
    %v1586 = vsel %vm1391, %v1585, %v1567
    %v1587 = vsel %vm1393, %v1586, %v1570
    %v1588 = vsel %vm1389, %v1548, %v1574
    %v1589 = vsel %vm1391, %v1588, %v1578
    %v1590 = vsel %vm1393, %v1589, %v1582
    %v1593 = vrot.slane %v1587, 4
    %v1594 = vrot.slane %v1590, 4
    %v1595 = vrot.slane %v1584, 4
    %1599 = vst [vmem:[#allocation3 + $0x30] sm:$0xf0] %v1593
    %1600 = vst [vmem:[#allocation3 + $0x38] sm:$0xf0] %v1594
    %1601 = vst.msk [vmem:[#allocation3 + $0x40] sm:$0xf0] %vm1440, %v1595
    %1602 = vrot.lane.b32.xlu0 %v1548, 32
    %v1603 = vpop.permute.xlu0 %1602
    %1605 = vrot.lane.b32.xlu0 %v1552, 64
    %v1606 = vpop.permute.xlu0 %1605
    %1608 = vrot.lane.b32.xlu0 %v1520, 96
    %v1609 = vpop.permute.xlu0 %1608
    %1612 = vrot.lane.b32.xlu0 %v1584, 32
    %v1613 = vpop.permute.xlu0 %1612
    %1616 = vrot.lane.b32.xlu0 %v1522, 64
    %v1617 = vpop.permute.xlu0 %1616
    %v1619 = vrot.slane %v1522, 1
    %1620 = vrot.lane.b32.xlu0 %v1619, 96
    %v1621 = vpop.permute.xlu0 %1620
    %v1623 = vrot.slane %v1522, 2
    %v1625 = vsel %vm1389, %v1518, %v1603
    %v1626 = vsel %vm1391, %v1625, %v1606
    %v1627 = vsel %vm1393, %v1626, %v1609
    %v1628 = vsel %vm1389, %v1580, %v1613
    %v1629 = vsel %vm1391, %v1628, %v1617
    %v1630 = vsel %vm1393, %v1629, %v1621
    %1631 = vst [vmem:[#allocation3 + $0x48] sm:$0xf] %v1627
    %1632 = vst [vmem:[#allocation3 + $0x50] sm:$0xf] %v1630
    %1633 = vst.msk [vmem:[#allocation3 + $0x58] sm:$0xf] %vm1400, %v1623
    %1634 = vrot.lane.b32.xlu0 %v1580, 32
    %v1635 = vpop.permute.xlu0 %1634
    %1637 = vrot.lane.b32.xlu0 %v1584, 64
    %v1638 = vpop.permute.xlu0 %1637
    %1640 = vrot.lane.b32.xlu0 %v1522, 96
    %v1641 = vpop.permute.xlu0 %1640
    %1644 = vrot.lane.b32.xlu0 %v1623, 32
    %v1645 = vpop.permute.xlu0 %1644
    %1648 = vrot.lane.b32.xlu0 %v1524, 64
    %v1649 = vpop.permute.xlu0 %1648
    %v1651 = vrot.slane %v1524, 1
    %1652 = vrot.lane.b32.xlu0 %v1651, 96
    %v1653 = vpop.permute.xlu0 %1652
    %v1655 = vrot.slane %v1524, 2
    %v1656 = vsel %vm1389, %v1520, %v1635
    %v1657 = vsel %vm1391, %v1656, %v1638
    %v1658 = vsel %vm1393, %v1657, %v1641
    %v1659 = vsel %vm1389, %v1619, %v1645
    %v1660 = vsel %vm1391, %v1659, %v1649
    %v1661 = vsel %vm1393, %v1660, %v1653
    %v1664 = vrot.slane %v1658, 4
    %v1665 = vrot.slane %v1661, 4
    %v1666 = vrot.slane %v1655, 4
    %1670 = vst [vmem:[#allocation3 + $0x48] sm:$0xf0] %v1664
    %1671 = vst [vmem:[#allocation3 + $0x50] sm:$0xf0] %v1665
    %1672 = vst.msk [vmem:[#allocation3 + $0x58] sm:$0xf0] %vm1440, %v1666
    %v1673 = vld [vmem:[#allocation3] sm:$0xff]
    %v1674 = vld [vmem:[#allocation3 + $0x8] sm:$0xff]
    %v1675 = vld [vmem:[#allocation3 + $0x10] sm:$0xff]
    %v1676 = vld [vmem:[#allocation3 + $0x18] sm:$0xff]
    %v1677 = vld [vmem:[#allocation3 + $0x20] sm:$0xff]
    %v1678 = vld [vmem:[#allocation3 + $0x28] sm:$0xff]
    %v1679 = vld [vmem:[#allocation3 + $0x30] sm:$0xff]
    %v1680 = vld [vmem:[#allocation3 + $0x38] sm:$0xff]
    %v1681 = vld [vmem:[#allocation3 + $0x40] sm:$0xff]
    %v1682 = vld [vmem:[#allocation3 + $0x48] sm:$0xff]
    %v1683 = vld [vmem:[#allocation3 + $0x50] sm:$0xff]
    %v1684 = vld [vmem:[#allocation3 + $0x58] sm:$0xff]
    %v1685 = vld [vmem:[%s3] sm:$0xff]
    %v1686 = vld [vmem:[%s3 + $0x8] sm:$0xff]
    %v1687 = vld [vmem:[%s3 + $0x10] sm:$0xff]
    %v1688 = vld [vmem:[%s3 + $0x18] sm:$0xff]
    %v1689 = vld [vmem:[%s3 + $0x20] sm:$0xff]
    %v1690 = vld [vmem:[%s3 + $0x28] sm:$0xff]
    %v1691 = vld [vmem:[%s3 + $0x30] sm:$0xff]
    %v1692 = vld [vmem:[%s3 + $0x38] sm:$0xff]
    %v1693 = vld [vmem:[%s3 + $0x40] sm:$0xff]
    %v1694 = vld [vmem:[%s3 + $0x48] sm:$0xff]
    %v1695 = vld [vmem:[%s3 + $0x50] sm:$0xff]
    %v1696 = vld [vmem:[%s3 + $0x58] sm:$0xff]
    %v1697 = vld [vmem:[%s3 + $0x60] sm:$0xff]
    %v1698 = vld [vmem:[%s3 + $0x68] sm:$0xff]
    %v1699 = vld [vmem:[%s3 + $0x70] sm:$0xff]
    %v1700 = vld [vmem:[%s3 + $0x78] sm:$0xff]
    %v1701 = vld [vmem:[%s3 + $0x80] sm:$0xff]
    %v1702 = vld [vmem:[%s3 + $0x88] sm:$0xff]
    %v1703 = vld [vmem:[%s3 + $0x90] sm:$0xff]
    %v1704 = vld [vmem:[%s3 + $0x98] sm:$0xff]
    %v1705 = vld [vmem:[%s3 + $0xa0] sm:$0xff]
    %v1706 = vld [vmem:[%s3 + $0xa8] sm:$0xff]
    %v1707 = vld [vmem:[%s3 + $0xb0] sm:$0xff]
    %v1708 = vld [vmem:[%s3 + $0xb8] sm:$0xff]
    %v1709 = vld [vmem:[%s3 + $0xc0] sm:$0xff]
    %v1710 = vld [vmem:[%s3 + $0xc8] sm:$0xff]
    %v1711 = vld [vmem:[%s3 + $0xd0] sm:$0xff]
    %v1712 = vld [vmem:[%s3 + $0xd8] sm:$0xff]
    %v1713 = vld [vmem:[%s3 + $0xe0] sm:$0xff]
    %v1714 = vld [vmem:[%s3 + $0xe8] sm:$0xff]
    %v1715 = vld [vmem:[%s3 + $0xf0] sm:$0xff]
    %v1716 = vld [vmem:[%s3 + $0xf8] sm:$0xff]
    %v1717 = vld [vmem:[%s3 + $0x100] sm:$0xff]
    %v1718 = vld [vmem:[%s3 + $0x108] sm:$0xff]
    %v1719 = vld [vmem:[%s3 + $0x110] sm:$0xff]
    %v1720 = vld [vmem:[%s3 + $0x118] sm:$0xff]
    %v1721 = vld [vmem:[%s4] sm:$0x1]
    %v1723 = vperm.slane %v1721, 0
    %v1726 = vsel %vm1389, %v1675, 0
    %v1729 = vsel %vm1389, %v1678, 0
    %v1732 = vsel %vm1389, %v1681, 0
    %v1735 = vsel %vm1389, %v1684, 0
    %1737 = vmatpush.msra.mxu0 %v1700
    %1738 = vmatpush.msra.mxu0 %v1699
    %1739 = vmatpush.msra.mxu0 %v1698
    %1740 = vmatpush.msra.mxu0 %v1697
    %1741 = vmatpush.msra.mxu0 %v1696
    %1742 = vmatpush.msra.mxu0 %v1695
    %1743 = vmatpush.msra.mxu0 %v1694
    %1744 = vmatpush.msra.mxu0 %v1693
    %1745 = vmatpush.msra.mxu0 %v1692
    %1746 = vmatpush.msra.mxu0 %v1691
    %1747 = vmatpush.msra.mxu0 %v1690
    %1748 = vmatpush.msra.mxu0 %v1689
    %1749 = vmatpush.msra.mxu0 %v1688
    %1750 = vmatpush.msra.mxu0 %v1687
    %1751 = vmatpush.msra.mxu0 %v1686
    %1752 = vmatpush.msra.mxu0 %v1685
    %1753 = vmatmul.f32.gmra.mxu0 %v1673
    %v1754 = vpop.f32.mrf.mxu0
    %v1755 = vadd.f32 %v1723, %v1754
    %1756 = vmatmul.f32.gmra.mxu0 %v1676
    %v1757 = vpop.f32.mrf.mxu0
    %v1758 = vadd.f32 %v1723, %v1757
    %1759 = vmatmul.f32.gmra.mxu0 %v1679
    %v1760 = vpop.f32.mrf.mxu0
    %v1761 = vadd.f32 %v1723, %v1760
    %1762 = vmatmul.f32.gmra.mxu0 %v1682
    %v1763 = vpop.f32.mrf.mxu0
    %v1764 = vadd.f32 %v1723, %v1763
    %1765 = vdwg.mxu0
    %1766 = vmatpush.msra.mxu0 %v1716
    %1767 = vmatpush.msra.mxu0 %v1715
    %1768 = vmatpush.msra.mxu0 %v1714
    %1769 = vmatpush.msra.mxu0 %v1713
    %1770 = vmatpush.msra.mxu0 %v1712
    %1771 = vmatpush.msra.mxu0 %v1711
    %1772 = vmatpush.msra.mxu0 %v1710
    %1773 = vmatpush.msra.mxu0 %v1709
    %1774 = vmatpush.msra.mxu0 %v1708
    %1775 = vmatpush.msra.mxu0 %v1707
    %1776 = vmatpush.msra.mxu0 %v1706
    %1777 = vmatpush.msra.mxu0 %v1705
    %1778 = vmatpush.msra.mxu0 %v1704
    %1779 = vmatpush.msra.mxu0 %v1703
    %1780 = vmatpush.msra.mxu0 %v1702
    %1781 = vmatpush.msra.mxu0 %v1701
    %1782 = vmatmul.f32.gmra.mxu0 %v1674
    %v1783 = vpop.f32.mrf.mxu0
    %v1784 = vadd.f32 %v1755, %v1783
    %1785 = vmatmul.f32.gmra.mxu0 %v1677
    %v1786 = vpop.f32.mrf.mxu0
    %v1787 = vadd.f32 %v1758, %v1786
    %1788 = vmatmul.f32.gmra.mxu0 %v1680
    %v1789 = vpop.f32.mrf.mxu0
    %v1790 = vadd.f32 %v1761, %v1789
    %1791 = vmatmul.f32.gmra.mxu0 %v1683
    %v1792 = vpop.f32.mrf.mxu0
    %v1793 = vadd.f32 %v1764, %v1792
    %1794 = vdwg.mxu0
    %1795 = vmatpush.msra.mxu0 0.0
    %1796 = vmatpush.msra.mxu0 0.0
    %1797 = vmatpush.msra.mxu0 0.0
    %1798 = vmatpush.msra.mxu0 0.0
    %1799 = vmatpush.msra.mxu0 0.0
    %1800 = vmatpush.msra.mxu0 0.0
    %1801 = vmatpush.msra.mxu0 0.0
    %1802 = vmatpush.msra.mxu0 0.0
    %1803 = vmatpush.msra.mxu0 0.0
    %1804 = vmatpush.msra.mxu0 0.0
    %1805 = vmatpush.msra.mxu0 0.0
    %1806 = vmatpush.msra.mxu0 0.0
    %1807 = vmatpush.msra.mxu0 %v1720
    %1808 = vmatpush.msra.mxu0 %v1719
    %1809 = vmatpush.msra.mxu0 %v1718
    %1810 = vmatpush.msra.mxu0 %v1717
    %1811 = vmatmul.f32.gmra.mxu0 %v1726
    %v1812 = vpop.f32.mrf.mxu0
    %v1813 = vadd.f32 %v1784, %v1812
    %1814 = vmatmul.f32.gmra.mxu0 %v1729
    %v1815 = vpop.f32.mrf.mxu0
    %v1816 = vadd.f32 %v1787, %v1815
    %1817 = vmatmul.f32.gmra.mxu0 %v1732
    %v1818 = vpop.f32.mrf.mxu0
    %v1819 = vadd.f32 %v1790, %v1818
    %1820 = vmatmul.f32.gmra.mxu0 %v1735
    %v1821 = vpop.f32.mrf.mxu0
    %v1822 = vadd.f32 %v1793, %v1821
    %1823 = vdwg.mxu0
    %v1824 = vmax.f32 %v1813, 0.0
    %v1825 = vmax.f32 %v1816, 0.0
    %v1826 = vmax.f32 %v1819, 0.0
    %v1827 = vmax.f32 %v1822, 0.0
    %vm1832 = vcmask 1046528
    %v1833 = vrot.slane %v1824, 1
    %v1834 = vrot.slane %v1825, 1
    %v1835 = vsel %vm1832, %v1833, %v1834
    %v1836 = vrot.slane %v1826, 1
    %v1837 = vsel %vm1832, %v1834, %v1836
    %v1838 = vrot.slane %v1827, 1
    %v1839 = vsel %vm1832, %v1836, %v1838
    %v1844 = vmax.f32 %v1824, %v1835
    %v1845 = vmax.f32 %v1825, %v1837
    %v1846 = vmax.f32 %v1826, %v1839
    %v1847 = vmax.f32 %v1827, %v1838
    %vm1852 = vcmask 1043456
    %v1853 = vrot.slane %v1844, 4
    %v1854 = vrot.slane %v1845, 4
    %v1855 = vsel %vm1852, %v1853, %v1854
    %v1856 = vrot.slane %v1846, 4
    %v1857 = vsel %vm1852, %v1854, %v1856
    %v1858 = vrot.slane %v1847, 4
    %v1859 = vsel %vm1852, %v1856, %v1858
    %v1864 = vmax.f32 %v1844, %v1855
    %v1865 = vmax.f32 %v1845, %v1857
    %v1866 = vmax.f32 %v1846, %v1859
    %v1867 = vmax.f32 %v1847, %v1858
    %vm1868 = vcmask 516096
    %1869 = vst.msk [vmem:[#allocation4] sm:$0x1] %vm1868, %v1864
    %1871 = vst.sshfl [vmem:[#allocation1] sm:$0xff pattern:$0x73625140] %v1864
    %s1872 = scalar_lea.vmem [#allocation1], 1
    %v1873 = vld [vmem:[%s1872] ss:$4 sm:$0xff]
    %1874 = vrot.lane.b32.xlu0 %v1873, 64
    %v1875 = vpop.permute.xlu0 %1874
    %vm1877 = vcmask 1040896
    %1878 = vst.msk [vmem:[#allocation4] sm:$0x1] %vm1877, %v1875
    %1879 = vst.msk [vmem:[#allocation4 + $0x2] sm:$0x1] %vm1868, %v1865
    %1881 = vst.sshfl [vmem:[#allocation1] sm:$0xff pattern:$0x73625140] %v1865
    %s1882 = scalar_lea.vmem [#allocation1], 1
    %v1883 = vld [vmem:[%s1882] ss:$4 sm:$0xff]
    %1884 = vrot.lane.b32.xlu0 %v1883, 64
    %v1885 = vpop.permute.xlu0 %1884
    %1887 = vst.msk [vmem:[#allocation4 + $0x2] sm:$0x1] %vm1877, %v1885
    %1888 = vst.msk [vmem:[#allocation4 + $0x1] sm:$0x1] %vm1868, %v1866
    %1890 = vst.sshfl [vmem:[#allocation1] sm:$0xff pattern:$0x73625140] %v1866
    %s1891 = scalar_lea.vmem [#allocation1], 1
    %v1892 = vld [vmem:[%s1891] ss:$4 sm:$0xff]
    %1893 = vrot.lane.b32.xlu0 %v1892, 64
    %v1894 = vpop.permute.xlu0 %1893
    %1896 = vst.msk [vmem:[#allocation4 + $0x1] sm:$0x1] %vm1877, %v1894
    %1897 = vst.msk [vmem:[#allocation4 + $0x3] sm:$0x1] %vm1868, %v1867
    %1899 = vst.sshfl [vmem:[#allocation1] sm:$0xff pattern:$0x73625140] %v1867
    %s1900 = scalar_lea.vmem [#allocation1], 1
    %v1901 = vld [vmem:[%s1900] ss:$4 sm:$0xff]
    %1902 = vrot.lane.b32.xlu0 %v1901, 64
    %v1903 = vpop.permute.xlu0 %1902
    %1905 = vst.msk [vmem:[#allocation4 + $0x3] sm:$0x1] %vm1877, %v1903
    %v1906 = vld [vmem:[#allocation4] sm:$0xf]
    %v1907 = vld [vmem:[%s5] sm:$0xff]
    %v1908 = vld [vmem:[%s5 + $0x8] sm:$0xff]
    %v1909 = vld [vmem:[%s5 + $0x10] sm:$0xff]
    %v1910 = vld [vmem:[%s5 + $0x18] sm:$0xff]
    %v1911 = vld [vmem:[%s5 + $0x20] sm:$0xff]
    %v1912 = vld [vmem:[%s5 + $0x28] sm:$0xff]
    %v1913 = vld [vmem:[%s5 + $0x30] sm:$0xff]
    %v1914 = vld [vmem:[%s5 + $0x38] sm:$0xff]
    %v1915 = vld [vmem:[%s5 + $0x40] sm:$0xff]
    %v1916 = vld [vmem:[%s5 + $0x48] sm:$0xff]
    %v1917 = vld [vmem:[%s5 + $0x50] sm:$0xff]
    %v1918 = vld [vmem:[%s5 + $0x58] sm:$0xff]
    %v1919 = vld [vmem:[%s5 + $0x60] sm:$0xff]
    %v1920 = vld [vmem:[%s5 + $0x68] sm:$0xff]
    %v1921 = vld [vmem:[%s5 + $0x70] sm:$0xff]
    %v1922 = vld [vmem:[%s5 + $0x78] sm:$0xff]
    %v1923 = vld [vmem:[%s5 + $0x80] sm:$0xff]
    %v1924 = vld [vmem:[%s5 + $0x88] sm:$0xff]
    %v1925 = vld [vmem:[%s5 + $0x90] sm:$0xff]
    %v1926 = vld [vmem:[%s5 + $0x98] sm:$0xff]
    %v1927 = vld [vmem:[%s5 + $0xa0] sm:$0xff]
    %v1928 = vld [vmem:[%s5 + $0xa8] sm:$0xff]
    %v1929 = vld [vmem:[%s5 + $0xb0] sm:$0xff]
    %v1930 = vld [vmem:[%s5 + $0xb8] sm:$0xff]
    %v1931 = vld [vmem:[%s5 + $0xc0] sm:$0xff]
    %v1932 = vld [vmem:[%s5 + $0xc8] sm:$0xff]
    %v1933 = vld [vmem:[%s5 + $0xd0] sm:$0xff]
    %v1934 = vld [vmem:[%s5 + $0xd8] sm:$0xff]
    %v1935 = vld [vmem:[%s5 + $0xe0] sm:$0xff]
    %v1936 = vld [vmem:[%s5 + $0xe8] sm:$0xff]
    %v1937 = vld [vmem:[%s5 + $0xf0] sm:$0xff]
    %v1938 = vld [vmem:[%s5 + $0xf8] sm:$0xff]
    %v1939 = vld [vmem:[%s6] sm:$0x1]
    %v1941 = vperm.slane %v1939, 0
    %1944 = vst [vmem:[#allocation1] ss:$4 sm:$0xff] %v1906
    %v1945 = vld.sshfl [vmem:[#allocation1] sm:$0xff pattern:$0x73625140]
    %v1946 = vld.sshfl [vmem:[#allocation1 + $0x8] sm:$0xff pattern:$0x73625140]
    %1949 = vmatpush.msra.mxu0 %v1922
    %1950 = vmatpush.msra.mxu0 %v1921
    %1951 = vmatpush.msra.mxu0 %v1920
    %1952 = vmatpush.msra.mxu0 %v1919
    %1953 = vmatpush.msra.mxu0 %v1918
    %1954 = vmatpush.msra.mxu0 %v1917
    %1955 = vmatpush.msra.mxu0 %v1916
    %1956 = vmatpush.msra.mxu0 %v1915
    %1957 = vmatpush.msra.mxu0 %v1914
    %1958 = vmatpush.msra.mxu0 %v1913
    %1959 = vmatpush.msra.mxu0 %v1912
    %1960 = vmatpush.msra.mxu0 %v1911
    %1961 = vmatpush.msra.mxu0 %v1910
    %1962 = vmatpush.msra.mxu0 %v1909
    %1963 = vmatpush.msra.mxu0 %v1908
    %1964 = vmatpush.msra.mxu0 %v1907
    %1965 = vmatmul.f32.gmra.mxu0 %v1945
    %v1966 = vpop.f32.mrf.mxu0
    %v1967 = vadd.f32 %v1941, %v1966
    %1968 = vdwg.mxu0
    %1969 = vmatpush.msra.mxu0 %v1938
    %1970 = vmatpush.msra.mxu0 %v1937
    %1971 = vmatpush.msra.mxu0 %v1936
    %1972 = vmatpush.msra.mxu0 %v1935
    %1973 = vmatpush.msra.mxu0 %v1934
    %1974 = vmatpush.msra.mxu0 %v1933
    %1975 = vmatpush.msra.mxu0 %v1932
    %1976 = vmatpush.msra.mxu0 %v1931
    %1977 = vmatpush.msra.mxu0 %v1930
    %1978 = vmatpush.msra.mxu0 %v1929
    %1979 = vmatpush.msra.mxu0 %v1928
    %1980 = vmatpush.msra.mxu0 %v1927
    %1981 = vmatpush.msra.mxu0 %v1926
    %1982 = vmatpush.msra.mxu0 %v1925
    %1983 = vmatpush.msra.mxu0 %v1924
    %1984 = vmatpush.msra.mxu0 %v1923
    %1985 = vmatmul.f32.gmra.mxu0 %v1946
    %v1986 = vpop.f32.mrf.mxu0
    %v1987 = vadd.f32 %v1967, %v1986
    %1988 = vdwg.mxu0
    %v1989 = vmax.f32 %v1987, 0.0
    %v1990 = vld [vmem:[%s7] sm:$0xff]
    %v1991 = vld [vmem:[%s7 + $0x8] sm:$0xff]
    %v1992 = vld [vmem:[%s7 + $0x10] sm:$0xff]
    %v1993 = vld [vmem:[%s7 + $0x18] sm:$0xff]
    %v1994 = vld [vmem:[%s7 + $0x20] sm:$0xff]
    %v1995 = vld [vmem:[%s7 + $0x28] sm:$0xff]
    %v1996 = vld [vmem:[%s7 + $0x30] sm:$0xff]
    %v1997 = vld [vmem:[%s7 + $0x38] sm:$0xff]
    %v1998 = vld [vmem:[%s7 + $0x40] sm:$0xff]
    %v1999 = vld [vmem:[%s7 + $0x48] sm:$0xff]
    %v2000 = vld [vmem:[%s7 + $0x50] sm:$0xff]
    %v2001 = vld [vmem:[%s7 + $0x58] sm:$0xff]
    %v2002 = vld [vmem:[%s7 + $0x60] sm:$0xff]
    %v2003 = vld [vmem:[%s7 + $0x68] sm:$0xff]
    %v2004 = vld [vmem:[%s7 + $0x70] sm:$0xff]
    %v2005 = vld [vmem:[%s7 + $0x78] sm:$0xff]
    %v2006 = vld [vmem:[%s8] sm:$0x1]
    %v2008 = vperm.slane %v2006, 0
    %2010 = vmatpush.msra.mxu0 %v2005
    %2011 = vmatpush.msra.mxu0 %v2004
    %2012 = vmatpush.msra.mxu0 %v2003
    %2013 = vmatpush.msra.mxu0 %v2002
    %2014 = vmatpush.msra.mxu0 %v2001
    %2015 = vmatpush.msra.mxu0 %v2000
    %2016 = vmatpush.msra.mxu0 %v1999
    %2017 = vmatpush.msra.mxu0 %v1998
    %2018 = vmatpush.msra.mxu0 %v1997
    %2019 = vmatpush.msra.mxu0 %v1996
    %2020 = vmatpush.msra.mxu0 %v1995
    %2021 = vmatpush.msra.mxu0 %v1994
    %2022 = vmatpush.msra.mxu0 %v1993
    %2023 = vmatpush.msra.mxu0 %v1992
    %2024 = vmatpush.msra.mxu0 %v1991
    %2025 = vmatpush.msra.mxu0 %v1990
    %2026 = vmatmul.f32.gmra.mxu0 %v1989
    %v2027 = vpop.f32.mrf.mxu0
    %v2028 = vadd.f32 %v2008, %v2027
    %2029 = vdwg.mxu0
    %vm2030 = vcmask 74752
    %2031 = vst.msk [vmem:[#allocation5] sm:$0x3] %vm2030, %v2028
    // Predicated region
    $region38: #{cnn_forward.1} parent=1 // pred_check
      _
    $region39: #{cnn_forward.1} parent=1 // pred_check_branch
      %2033 = sbr.rel (0) target = $region41
    $region40: #{cnn_forward.1} parent=1 // pred_region
      %2035 = vsyncadd [#allocation6], 0
      %s2037 = sshll.u32 [#allocation5], 4
      %s2038 = int_to_ptr.vmem [resolvable:$true] %s2037
      %s2039 = sshll.u32 %s9, 4
      %s2040 = int_to_ptr.hbm [resolvable:$true] %s2039
      %2042 = dma.vmem_to_hbm [thread:$0]  %s2038, 32, %s2040, [#allocation6]
    $region41: #{cnn_forward.1} parent=1 // pred_fallthru
      _
    // Predicated region
    $region42: #{cnn_forward.1} parent=1 // pred_check
      _
    $region43: #{cnn_forward.1} parent=1 // pred_check_branch
      %2044 = sbr.rel (0) target = $region45
    $region44: #{cnn_forward.1} parent=1 // pred_region
      %2046 = dma.done [#allocation6], 32
    $region45: #{cnn_forward.1} parent=1 // pred_fallthru
      _
    %2047 = vsyncpa [#allocation6], 1

</llo_original>
